<compile_context>
chip_gen: v6e
topology: v6e:2x2x1
jax: 0.10.0
libtpu: 0.0.40
codegen_flags: <defaults>
</compile_context>

<pallas_src>
import math
import numpy as np
import jax
import jax.numpy as jnp
from jax.experimental import pallas as pl
from jax.experimental.pallas import tpu as pltpu

# ---- model hyperparameters (small, consistent with the module) ----
BATCH = 2
SEQ = 8
EMBED = 32
NUM_HEADS = 4
HEAD_DIM = EMBED // NUM_HEADS
FFN_HIDDEN = 64
LN_EPS = 1e-5          # PyTorch nn.LayerNorm default
VEC_W = 3 * EMBED      # lane width of the packed bias/LN vector slab


def _layernorm(v, gamma, beta):
    mu = jnp.mean(v, axis=-1, keepdims=True)
    var = jnp.mean((v - mu) ** 2, axis=-1, keepdims=True)
    return (v - mu) * jax.lax.rsqrt(var + LN_EPS) * gamma + beta


def _gelu_exact(x):
    # PyTorch nn.GELU() default (approximate='none'): 0.5*x*(1+erf(x/sqrt(2)))
    return 0.5 * x * (1.0 + jax.lax.erf(x * (1.0 / math.sqrt(2.0))))


def encoder_kernel(x_ref, wqkv_ref, wo_ref, w1_ref, w2_ref, vec_ref, out_ref, attn_ref):
    x = x_ref[...]                                   # (B*S, D) = (16, 32)

    # --- unpack the small-vector slab (loaded once) ---
    vecs = vec_ref[...]                              # (8, 3D)
    b_qkv = vecs[0:1, :]                             # (1, 3D)
    b1    = vecs[1:2, :FFN_HIDDEN]                   # (1, F)
    ln1_g = vecs[2:3, :EMBED]
    ln1_b = vecs[3:4, :EMBED]
    ln2_g = vecs[4:5, :EMBED]
    ln2_b = vecs[5:6, :EMBED]
    bo    = vecs[6:7, :EMBED]
    b2    = vecs[7:8, :EMBED]

    # --- LayerNorm1 over the feature axis, all B*S rows at once ---
    ln1 = _layernorm(x, ln1_g, ln1_b)

    # --- fused QKV projection: one (B*S, D) @ (D, 3D) matmul ---
    qkv = jnp.dot(ln1, wqkv_ref[...], preferred_element_type=jnp.float32) + b_qkv

    # View as (B, S, D); the leading-dim split is sublane-tile aligned (S == 8).
    q = qkv[:, 0 * EMBED:1 * EMBED].reshape(BATCH, SEQ, EMBED)
    k = qkv[:, 1 * EMBED:2 * EMBED].reshape(BATCH, SEQ, EMBED)
    v = qkv[:, 2 * EMBED:3 * EMBED].reshape(BATCH, SEQ, EMBED)

    wo = wo_ref[...]                                 # (D, D)
    scale = 1.0 / math.sqrt(float(HEAD_DIM))
    acc = jnp.zeros((BATCH * SEQ, EMBED), jnp.float32)   # attention-output accumulator

    for h in range(NUM_HEADS):                       # static, fully unrolled
        sl = slice(h * HEAD_DIM, (h + 1) * HEAD_DIM)
        qh, kh, vh = q[:, :, sl], k[:, :, sl], v[:, :, sl]          # (B, S, Hd)

        s = jnp.einsum("bqd,bkd->bqk", qh, kh,
                       preferred_element_type=jnp.float32) * scale  # (B, S, S)
        s = s - jnp.max(s, axis=-1, keepdims=True)
        e = jnp.exp(s)
        probs = e * pl.reciprocal(jnp.sum(e, axis=-1, keepdims=True), approx=True)

        attn_ref[h] = probs                          # direct per-head write (no stack)

        ctx = jnp.einsum("bqk,bkd->bqd", probs, vh,
                         preferred_element_type=jnp.float32)        # (B, S, Hd)
        # Output projection accumulated per head (replaces concat + one big matmul).
        acc = acc + jnp.dot(ctx.reshape(BATCH * SEQ, HEAD_DIM), wo[sl, :],
                            preferred_element_type=jnp.float32)

    attn_out = acc + bo

    # --- residual 1 ---
    x1 = attn_out + x

    # --- LayerNorm2 + FFN (Linear -> GELU -> Linear) ---
    ln2 = _layernorm(x1, ln2_g, ln2_b)
    h1 = jnp.dot(ln2, w1_ref[...], preferred_element_type=jnp.float32) + b1
    h1 = _gelu_exact(h1)
    ffn = jnp.dot(h1, w2_ref[...], preferred_element_type=jnp.float32) + b2

    # --- residual 2 ---
    out_ref[...] = ffn + x1


@jax.jit
def transformer_encoder(x, params):
    B, S, D = x.shape
    H = NUM_HEADS

    # Pack QKV projection weights/biases (wrapper-side, free under XLA).
    w_qkv = jnp.concatenate([params["wq"], params["wk"], params["wv"]], axis=1)  # (D, 3D)
    b_qkv = jnp.concatenate([params["bq"], params["bk"], params["bv"]], axis=1)  # (1, 3D)

    def pad_to(vec, w):
        return jnp.pad(vec, ((0, 0), (0, w - vec.shape[1])))

    # Pack the 8 small vectors into one (8, 3D) slab -> one DMA instead of eight.
    vec_pack = jnp.concatenate(
        [
            b_qkv,                                # row 0
            pad_to(params["b1"], VEC_W),          # row 1
            pad_to(params["ln1_g"], VEC_W),       # row 2
            pad_to(params["ln1_b"], VEC_W),       # row 3
            pad_to(params["ln2_g"], VEC_W),       # row 4
            pad_to(params["ln2_b"], VEC_W),       # row 5
            pad_to(params["bo"], VEC_W),          # row 6
            pad_to(params["b2"], VEC_W),          # row 7
        ],
        axis=0,
    )                                             # (8, 3D)

    vmem = pl.BlockSpec(memory_space=pltpu.MemorySpace.VMEM)
    fn = pl.pallas_call(
        encoder_kernel,
        out_shape=(
            jax.ShapeDtypeStruct((B * S, D), jnp.float32),    # folded activations
            jax.ShapeDtypeStruct((H, B, S, S), jnp.float32),  # head-major attn probs
        ),
        in_specs=[vmem] * 6,
        out_specs=(vmem, vmem),
    )

    out2, attn_hb = fn(
        x.reshape(B * S, D), w_qkv, params["wo"], params["w1"], params["w2"], vec_pack
    )
    # Free layout fix-ups outside the kernel.
    out = out2.reshape(B, S, D)
    attn = jnp.transpose(attn_hb, (1, 0, 2, 3))               # (B, H, S, S)
    return out, attn


def make_params(key):
    # Deterministic synthetic parameters. Linear weights are stored in
    # (in_features, out_features) layout so the kernel computes y = x @ W + b
    # (equivalent to PyTorch's x @ W.T + b with W_pt = W.T).
    ks = jax.random.split(key, 8)
    scale = 0.1
    p = {
        "ln1_g": jnp.ones((1, EMBED), jnp.float32),
        "ln1_b": jnp.zeros((1, EMBED), jnp.float32),
        "ln2_g": jnp.ones((1, EMBED), jnp.float32),
        "ln2_b": jnp.zeros((1, EMBED), jnp.float32),
        "wq": scale * jax.random.normal(ks[0], (EMBED, EMBED), jnp.float32),
        "wk": scale * jax.random.normal(ks[1], (EMBED, EMBED), jnp.float32),
        "wv": scale * jax.random.normal(ks[2], (EMBED, EMBED), jnp.float32),
        "wo": scale * jax.random.normal(ks[3], (EMBED, EMBED), jnp.float32),
        "bq": scale * jax.random.normal(ks[4], (1, EMBED), jnp.float32),
        "bk": jnp.zeros((1, EMBED), jnp.float32),
        "bv": jnp.zeros((1, EMBED), jnp.float32),
        "bo": jnp.zeros((1, EMBED), jnp.float32),
        "w1": scale * jax.random.normal(ks[5], (EMBED, FFN_HIDDEN), jnp.float32),
        "b1": scale * jax.random.normal(ks[6], (1, FFN_HIDDEN), jnp.float32),
        "w2": scale * jax.random.normal(ks[7], (FFN_HIDDEN, EMBED), jnp.float32),
        "b2": jnp.zeros((1, EMBED), jnp.float32),
    }
    return p


def reference(x, p):
    # Pure-JAX reference for a sanity check (exact softmax divide, exact erf GELU).
    def ln(v, g, b):
        mu = v.mean(-1, keepdims=True)
        var = ((v - mu) ** 2).mean(-1, keepdims=True)
        return (v - mu) / jnp.sqrt(var + LN_EPS) * g + b

    o = ln(x, p["ln1_g"], p["ln1_b"])
    q = o @ p["wq"] + p["bq"]
    k = o @ p["wk"] + p["bk"]
    v = o @ p["wv"] + p["bv"]
    B, S, D = x.shape

    def split(t):
        return t.reshape(B, S, NUM_HEADS, HEAD_DIM).transpose(0, 2, 1, 3)

    qh, kh, vh = split(q), split(k), split(v)
    scores = jnp.einsum("bhqd,bhkd->bhqk", qh, kh) / math.sqrt(HEAD_DIM)
    probs = jax.nn.softmax(scores, axis=-1)
    ctx = jnp.einsum("bhqk,bhkd->bhqd", probs, vh)
    ctx = ctx.transpose(0, 2, 1, 3).reshape(B, S, D)
    attn_out = ctx @ p["wo"] + p["bo"]
    x1 = attn_out + x
    o2 = ln(x1, p["ln2_g"], p["ln2_b"])
    h = o2 @ p["w1"] + p["b1"]
    h = 0.5 * h * (1.0 + jax.lax.erf(h / math.sqrt(2.0)))
    ffn = h @ p["w2"] + p["b2"]
    return ffn + x1, probs


if __name__ == "__main__":
    key = jax.random.PRNGKey(0)
    kx, kp = jax.random.split(key)
    x = jax.random.normal(kx, (BATCH, SEQ, EMBED), jnp.float32)
    params = make_params(kp)

    out, attn = transformer_encoder(x, params)
    out = jax.block_until_ready(out)
    attn = jax.block_until_ready(attn)

    ref_out, ref_attn = reference(x, params)
    # Tolerance relaxed from 1e-5 to 5e-3 because the kernel uses the approximate
    # EUP reciprocal (pl.reciprocal(..., approx=True)) for the softmax denominator.
    np.testing.assert_allclose(np.asarray(out), np.asarray(ref_out), rtol=5e-3, atol=5e-3)
    np.testing.assert_allclose(np.asarray(attn), np.asarray(ref_attn), rtol=5e-3, atol=5e-3)

    print("KERNEL_OK")
</pallas_src>

<mosaic_0001>
module attributes {stable_mosaic.version = 11 : i64} {
  func.func @encoder_kernel(%arg0: memref<16x32xf32, #tpu.memory_space<vmem>>, %arg1: memref<32x96xf32, #tpu.memory_space<vmem>>, %arg2: memref<32x32xf32, #tpu.memory_space<vmem>>, %arg3: memref<32x64xf32, #tpu.memory_space<vmem>>, %arg4: memref<64x32xf32, #tpu.memory_space<vmem>>, %arg5: memref<8x96xf32, #tpu.memory_space<vmem>>, %arg6: memref<16x32xf32, #tpu.memory_space<vmem>>, %arg7: memref<4x2x8x8xf32, #tpu.memory_space<vmem>>) attributes {dimension_semantics = [], scalar_prefetch = 0 : i64, scratch_operands = 0 : i64, tpu.core_type = #tpu.core_type<tc>} {
    %c0 = arith.constant 0 : index
    %c0_0 = arith.constant 0 : index
    %0 = vector.load %arg0[%c0, %c0_0] : memref<16x32xf32, #tpu.memory_space<vmem>>, vector<16x32xf32>
    %c0_1 = arith.constant 0 : index
    %c0_2 = arith.constant 0 : index
    %1 = vector.load %arg5[%c0_1, %c0_2] : memref<8x96xf32, #tpu.memory_space<vmem>>, vector<8x96xf32>
    %2 = vector.extract_strided_slice %1 {offsets = [0, 0], sizes = [1, 96], strides = [1, 1]} : vector<8x96xf32> to vector<1x96xf32>
    %3 = vector.extract_strided_slice %1 {offsets = [1, 0], sizes = [1, 64], strides = [1, 1]} : vector<8x96xf32> to vector<1x64xf32>
    %4 = vector.extract_strided_slice %1 {offsets = [2, 0], sizes = [1, 32], strides = [1, 1]} : vector<8x96xf32> to vector<1x32xf32>
    %5 = vector.extract_strided_slice %1 {offsets = [3, 0], sizes = [1, 32], strides = [1, 1]} : vector<8x96xf32> to vector<1x32xf32>
    %6 = vector.extract_strided_slice %1 {offsets = [4, 0], sizes = [1, 32], strides = [1, 1]} : vector<8x96xf32> to vector<1x32xf32>
    %7 = vector.extract_strided_slice %1 {offsets = [5, 0], sizes = [1, 32], strides = [1, 1]} : vector<8x96xf32> to vector<1x32xf32>
    %8 = vector.extract_strided_slice %1 {offsets = [6, 0], sizes = [1, 32], strides = [1, 1]} : vector<8x96xf32> to vector<1x32xf32>
    %9 = vector.extract_strided_slice %1 {offsets = [7, 0], sizes = [1, 32], strides = [1, 1]} : vector<8x96xf32> to vector<1x32xf32>
    %cst = arith.constant dense<0.000000e+00> : vector<16xf32>
    %10 = vector.multi_reduction <add>, %0, %cst [1] : vector<16x32xf32> to vector<16xf32>
    %11 = vector.shape_cast %10 : vector<16xf32> to vector<16x1xf32>
    %cst_3 = arith.constant 3.200000e+01 : f32
    %12 = vector.broadcast %cst_3 : f32 to vector<16x1xf32>
    %13 = arith.divf %11, %12 : vector<16x1xf32>
    %14 = vector.broadcast %13 : vector<16x1xf32> to vector<16x32xf32>
    %15 = arith.subf %0, %14 : vector<16x32xf32>
    %16 = arith.mulf %15, %15 : vector<16x32xf32>
    %cst_4 = arith.constant dense<0.000000e+00> : vector<16xf32>
    %17 = vector.multi_reduction <add>, %16, %cst_4 [1] : vector<16x32xf32> to vector<16xf32>
    %18 = vector.shape_cast %17 : vector<16xf32> to vector<16x1xf32>
    %cst_5 = arith.constant 3.200000e+01 : f32
    %19 = vector.broadcast %cst_5 : f32 to vector<16x1xf32>
    %20 = arith.divf %18, %19 : vector<16x1xf32>
    %21 = vector.broadcast %13 : vector<16x1xf32> to vector<16x32xf32>
    %22 = arith.subf %0, %21 : vector<16x32xf32>
    %cst_6 = arith.constant 9.99999974E-6 : f32
    %23 = vector.broadcast %cst_6 : f32 to vector<16x1xf32>
    %24 = arith.addf %20, %23 : vector<16x1xf32>
    %25 = math.rsqrt %24 : vector<16x1xf32>
    %26 = vector.broadcast %25 : vector<16x1xf32> to vector<16x32xf32>
    %27 = arith.mulf %22, %26 : vector<16x32xf32>
    %28 = vector.broadcast %4 : vector<1x32xf32> to vector<16x32xf32>
    %29 = arith.mulf %27, %28 : vector<16x32xf32>
    %30 = vector.broadcast %5 : vector<1x32xf32> to vector<16x32xf32>
    %31 = arith.addf %29, %30 : vector<16x32xf32>
    %c0_7 = arith.constant 0 : index
    %c0_8 = arith.constant 0 : index
    %32 = vector.load %arg1[%c0_7, %c0_8] : memref<32x96xf32, #tpu.memory_space<vmem>>, vector<32x96xf32>
    %cst_9 = arith.constant dense<0.000000e+00> : vector<16x96xf32>
    %33 = tpu.matmul %31, %32, %cst_9 {dimension_numbers = #tpu.dot_dimension_numbers<[1], [0], [0], [1], [0, 0, 1, 1], [], []>} : vector<16x32xf32>, vector<32x96xf32>, vector<16x96xf32> -> vector<16x96xf32>
    %34 = vector.broadcast %2 : vector<1x96xf32> to vector<16x96xf32>
    %35 = arith.addf %33, %34 : vector<16x96xf32>
    %36 = vector.extract_strided_slice %35 {offsets = [0, 0], sizes = [16, 32], strides = [1, 1]} : vector<16x96xf32> to vector<16x32xf32>
    %37 = vector.shape_cast %36 : vector<16x32xf32> to vector<2x8x32xf32>
    %38 = vector.extract_strided_slice %35 {offsets = [0, 32], sizes = [16, 32], strides = [1, 1]} : vector<16x96xf32> to vector<16x32xf32>
    %39 = vector.shape_cast %38 : vector<16x32xf32> to vector<2x8x32xf32>
    %40 = vector.extract_strided_slice %35 {offsets = [0, 64], sizes = [16, 32], strides = [1, 1]} : vector<16x96xf32> to vector<16x32xf32>
    %41 = vector.shape_cast %40 : vector<16x32xf32> to vector<2x8x32xf32>
    %c0_10 = arith.constant 0 : index
    %c0_11 = arith.constant 0 : index
    %42 = vector.load %arg2[%c0_10, %c0_11] : memref<32x32xf32, #tpu.memory_space<vmem>>, vector<32x32xf32>
    %cst_12 = arith.constant 0.000000e+00 : f32
    %43 = vector.broadcast %cst_12 : f32 to vector<16x32xf32>
    %44 = vector.extract_strided_slice %37 {offsets = [0, 0, 0], sizes = [2, 8, 8], strides = [1, 1, 1]} : vector<2x8x32xf32> to vector<2x8x8xf32>
    %45 = vector.extract_strided_slice %39 {offsets = [0, 0, 0], sizes = [2, 8, 8], strides = [1, 1, 1]} : vector<2x8x32xf32> to vector<2x8x8xf32>
    %46 = vector.extract_strided_slice %41 {offsets = [0, 0, 0], sizes = [2, 8, 8], strides = [1, 1, 1]} : vector<2x8x32xf32> to vector<2x8x8xf32>
    "tpu.trace_start"() <{level = 10 : i32, message = "bqd,bkd->bqk"}> : () -> ()
    %cst_13 = arith.constant dense<0.000000e+00> : vector<2x8x8xf32>
    %47 = tpu.matmul %44, %45, %cst_13 {dimension_numbers = #tpu.dot_dimension_numbers<[2], [2], [1], [1], [0, 0, 0, 1, 1, 1], [0], [0]>} : vector<2x8x8xf32>, vector<2x8x8xf32>, vector<2x8x8xf32> -> vector<2x8x8xf32>
    "tpu.trace_stop"() : () -> ()
    %cst_14 = arith.constant 0.353553385 : f32
    %48 = vector.broadcast %cst_14 : f32 to vector<2x8x8xf32>
    %49 = arith.mulf %47, %48 : vector<2x8x8xf32>
    %cst_15 = arith.constant dense<0xFF800000> : vector<2x8xf32>
    %50 = vector.multi_reduction <maximumf>, %49, %cst_15 [2] : vector<2x8x8xf32> to vector<2x8xf32>
    %51 = vector.shape_cast %50 : vector<2x8xf32> to vector<2x8x1xf32>
    %52 = vector.broadcast %51 : vector<2x8x1xf32> to vector<2x8x8xf32>
    %53 = arith.subf %49, %52 : vector<2x8x8xf32>
    %54 = math.exp %53 : vector<2x8x8xf32>
    %cst_16 = arith.constant dense<0.000000e+00> : vector<2x8xf32>
    %55 = vector.multi_reduction <add>, %54, %cst_16 [2] : vector<2x8x8xf32> to vector<2x8xf32>
    %56 = vector.shape_cast %55 : vector<2x8xf32> to vector<2x8x1xf32>
    %57 = tpu.reciprocal %56 {approx = true} : vector<2x8x1xf32> -> vector<2x8x1xf32>
    %58 = vector.broadcast %57 : vector<2x8x1xf32> to vector<2x8x8xf32>
    %59 = arith.mulf %54, %58 : vector<2x8x8xf32>
    %c0_17 = arith.constant 0 : index
    %c0_18 = arith.constant 0 : index
    %c0_19 = arith.constant 0 : index
    %c0_20 = arith.constant 0 : index
    %60 = vector.load %arg7[%c0_17, %c0_18, %c0_19, %c0_20] : memref<4x2x8x8xf32, #tpu.memory_space<vmem>>, vector<1x2x8x8xf32>
    %61 = vector.shape_cast %60 : vector<1x2x8x8xf32> to vector<2x8x8xf32>
    %62 = vector.shape_cast %59 : vector<2x8x8xf32> to vector<1x2x8x8xf32>
    tpu.vector_store %arg7[%c0_17, %c0_18, %c0_19, %c0_20], %62 {strides = array<i32>} : memref<4x2x8x8xf32, #tpu.memory_space<vmem>>, vector<1x2x8x8xf32>,
    "tpu.trace_start"() <{level = 10 : i32, message = "bqk,bkd->bqd"}> : () -> ()
    %cst_21 = arith.constant dense<0.000000e+00> : vector<2x8x8xf32>
    %63 = tpu.matmul %59, %46, %cst_21 {dimension_numbers = #tpu.dot_dimension_numbers<[2], [1], [1], [2], [0, 0, 0, 1, 1, 2], [0], [0]>} : vector<2x8x8xf32>, vector<2x8x8xf32>, vector<2x8x8xf32> -> vector<2x8x8xf32>
    "tpu.trace_stop"() : () -> ()
    %64 = vector.shape_cast %63 : vector<2x8x8xf32> to vector<16x8xf32>
    %65 = vector.extract_strided_slice %42 {offsets = [0, 0], sizes = [8, 32], strides = [1, 1]} : vector<32x32xf32> to vector<8x32xf32>
    %cst_22 = arith.constant dense<0.000000e+00> : vector<16x32xf32>
    %66 = tpu.matmul %64, %65, %cst_22 {dimension_numbers = #tpu.dot_dimension_numbers<[1], [0], [0], [1], [0, 0, 1, 1], [], []>} : vector<16x8xf32>, vector<8x32xf32>, vector<16x32xf32> -> vector<16x32xf32>
    %67 = arith.addf %43, %66 : vector<16x32xf32>
    %68 = vector.extract_strided_slice %37 {offsets = [0, 0, 8], sizes = [2, 8, 8], strides = [1, 1, 1]} : vector<2x8x32xf32> to vector<2x8x8xf32>
    %69 = vector.extract_strided_slice %39 {offsets = [0, 0, 8], sizes = [2, 8, 8], strides = [1, 1, 1]} : vector<2x8x32xf32> to vector<2x8x8xf32>
    %70 = vector.extract_strided_slice %41 {offsets = [0, 0, 8], sizes = [2, 8, 8], strides = [1, 1, 1]} : vector<2x8x32xf32> to vector<2x8x8xf32>
    "tpu.trace_start"() <{level = 10 : i32, message = "bqd,bkd->bqk"}> : () -> ()
    %cst_23 = arith.constant dense<0.000000e+00> : vector<2x8x8xf32>
    %71 = tpu.matmul %68, %69, %cst_23 {dimension_numbers = #tpu.dot_dimension_numbers<[2], [2], [1], [1], [0, 0, 0, 1, 1, 1], [0], [0]>} : vector<2x8x8xf32>, vector<2x8x8xf32>, vector<2x8x8xf32> -> vector<2x8x8xf32>
    "tpu.trace_stop"() : () -> ()
    %cst_24 = arith.constant 0.353553385 : f32
    %72 = vector.broadcast %cst_24 : f32 to vector<2x8x8xf32>
    %73 = arith.mulf %71, %72 : vector<2x8x8xf32>
    %cst_25 = arith.constant dense<0xFF800000> : vector<2x8xf32>
    %74 = vector.multi_reduction <maximumf>, %73, %cst_25 [2] : vector<2x8x8xf32> to vector<2x8xf32>
    %75 = vector.shape_cast %74 : vector<2x8xf32> to vector<2x8x1xf32>
    %76 = vector.broadcast %75 : vector<2x8x1xf32> to vector<2x8x8xf32>
    %77 = arith.subf %73, %76 : vector<2x8x8xf32>
    %78 = math.exp %77 : vector<2x8x8xf32>
    %cst_26 = arith.constant dense<0.000000e+00> : vector<2x8xf32>
    %79 = vector.multi_reduction <add>, %78, %cst_26 [2] : vector<2x8x8xf32> to vector<2x8xf32>
    %80 = vector.shape_cast %79 : vector<2x8xf32> to vector<2x8x1xf32>
    %81 = tpu.reciprocal %80 {approx = true} : vector<2x8x1xf32> -> vector<2x8x1xf32>
    %82 = vector.broadcast %81 : vector<2x8x1xf32> to vector<2x8x8xf32>
    %83 = arith.mulf %78, %82 : vector<2x8x8xf32>
    %c1 = arith.constant 1 : index
    %c0_27 = arith.constant 0 : index
    %c0_28 = arith.constant 0 : index
    %c0_29 = arith.constant 0 : index
    %84 = vector.load %arg7[%c1, %c0_27, %c0_28, %c0_29] : memref<4x2x8x8xf32, #tpu.memory_space<vmem>>, vector<1x2x8x8xf32>
    %85 = vector.shape_cast %84 : vector<1x2x8x8xf32> to vector<2x8x8xf32>
    %86 = vector.shape_cast %83 : vector<2x8x8xf32> to vector<1x2x8x8xf32>
    tpu.vector_store %arg7[%c1, %c0_27, %c0_28, %c0_29], %86 {strides = array<i32>} : memref<4x2x8x8xf32, #tpu.memory_space<vmem>>, vector<1x2x8x8xf32>,
    "tpu.trace_start"() <{level = 10 : i32, message = "bqk,bkd->bqd"}> : () -> ()
    %cst_30 = arith.constant dense<0.000000e+00> : vector<2x8x8xf32>
    %87 = tpu.matmul %83, %70, %cst_30 {dimension_numbers = #tpu.dot_dimension_numbers<[2], [1], [1], [2], [0, 0, 0, 1, 1, 2], [0], [0]>} : vector<2x8x8xf32>, vector<2x8x8xf32>, vector<2x8x8xf32> -> vector<2x8x8xf32>
    "tpu.trace_stop"() : () -> ()
    %88 = vector.shape_cast %87 : vector<2x8x8xf32> to vector<16x8xf32>
    %89 = vector.extract_strided_slice %42 {offsets = [8, 0], sizes = [8, 32], strides = [1, 1]} : vector<32x32xf32> to vector<8x32xf32>
    %cst_31 = arith.constant dense<0.000000e+00> : vector<16x32xf32>
    %90 = tpu.matmul %88, %89, %cst_31 {dimension_numbers = #tpu.dot_dimension_numbers<[1], [0], [0], [1], [0, 0, 1, 1], [], []>} : vector<16x8xf32>, vector<8x32xf32>, vector<16x32xf32> -> vector<16x32xf32>
    %91 = arith.addf %67, %90 : vector<16x32xf32>
    %92 = vector.extract_strided_slice %37 {offsets = [0, 0, 16], sizes = [2, 8, 8], strides = [1, 1, 1]} : vector<2x8x32xf32> to vector<2x8x8xf32>
    %93 = vector.extract_strided_slice %39 {offsets = [0, 0, 16], sizes = [2, 8, 8], strides = [1, 1, 1]} : vector<2x8x32xf32> to vector<2x8x8xf32>
    %94 = vector.extract_strided_slice %41 {offsets = [0, 0, 16], sizes = [2, 8, 8], strides = [1, 1, 1]} : vector<2x8x32xf32> to vector<2x8x8xf32>
    "tpu.trace_start"() <{level = 10 : i32, message = "bqd,bkd->bqk"}> : () -> ()
    %cst_32 = arith.constant dense<0.000000e+00> : vector<2x8x8xf32>
    %95 = tpu.matmul %92, %93, %cst_32 {dimension_numbers = #tpu.dot_dimension_numbers<[2], [2], [1], [1], [0, 0, 0, 1, 1, 1], [0], [0]>} : vector<2x8x8xf32>, vector<2x8x8xf32>, vector<2x8x8xf32> -> vector<2x8x8xf32>
    "tpu.trace_stop"() : () -> ()
    %cst_33 = arith.constant 0.353553385 : f32
    %96 = vector.broadcast %cst_33 : f32 to vector<2x8x8xf32>
    %97 = arith.mulf %95, %96 : vector<2x8x8xf32>
    %cst_34 = arith.constant dense<0xFF800000> : vector<2x8xf32>
    %98 = vector.multi_reduction <maximumf>, %97, %cst_34 [2] : vector<2x8x8xf32> to vector<2x8xf32>
    %99 = vector.shape_cast %98 : vector<2x8xf32> to vector<2x8x1xf32>
    %100 = vector.broadcast %99 : vector<2x8x1xf32> to vector<2x8x8xf32>
    %101 = arith.subf %97, %100 : vector<2x8x8xf32>
    %102 = math.exp %101 : vector<2x8x8xf32>
    %cst_35 = arith.constant dense<0.000000e+00> : vector<2x8xf32>
    %103 = vector.multi_reduction <add>, %102, %cst_35 [2] : vector<2x8x8xf32> to vector<2x8xf32>
    %104 = vector.shape_cast %103 : vector<2x8xf32> to vector<2x8x1xf32>
    %105 = tpu.reciprocal %104 {approx = true} : vector<2x8x1xf32> -> vector<2x8x1xf32>
    %106 = vector.broadcast %105 : vector<2x8x1xf32> to vector<2x8x8xf32>
    %107 = arith.mulf %102, %106 : vector<2x8x8xf32>
    %c2 = arith.constant 2 : index
    %c0_36 = arith.constant 0 : index
    %c0_37 = arith.constant 0 : index
    %c0_38 = arith.constant 0 : index
    %108 = vector.load %arg7[%c2, %c0_36, %c0_37, %c0_38] : memref<4x2x8x8xf32, #tpu.memory_space<vmem>>, vector<1x2x8x8xf32>
    %109 = vector.shape_cast %108 : vector<1x2x8x8xf32> to vector<2x8x8xf32>
    %110 = vector.shape_cast %107 : vector<2x8x8xf32> to vector<1x2x8x8xf32>
    tpu.vector_store %arg7[%c2, %c0_36, %c0_37, %c0_38], %110 {strides = array<i32>} : memref<4x2x8x8xf32, #tpu.memory_space<vmem>>, vector<1x2x8x8xf32>,
    "tpu.trace_start"() <{level = 10 : i32, message = "bqk,bkd->bqd"}> : () -> ()
    %cst_39 = arith.constant dense<0.000000e+00> : vector<2x8x8xf32>
    %111 = tpu.matmul %107, %94, %cst_39 {dimension_numbers = #tpu.dot_dimension_numbers<[2], [1], [1], [2], [0, 0, 0, 1, 1, 2], [0], [0]>} : vector<2x8x8xf32>, vector<2x8x8xf32>, vector<2x8x8xf32> -> vector<2x8x8xf32>
    "tpu.trace_stop"() : () -> ()
    %112 = vector.shape_cast %111 : vector<2x8x8xf32> to vector<16x8xf32>
    %113 = vector.extract_strided_slice %42 {offsets = [16, 0], sizes = [8, 32], strides = [1, 1]} : vector<32x32xf32> to vector<8x32xf32>
    %cst_40 = arith.constant dense<0.000000e+00> : vector<16x32xf32>
    %114 = tpu.matmul %112, %113, %cst_40 {dimension_numbers = #tpu.dot_dimension_numbers<[1], [0], [0], [1], [0, 0, 1, 1], [], []>} : vector<16x8xf32>, vector<8x32xf32>, vector<16x32xf32> -> vector<16x32xf32>
    %115 = arith.addf %91, %114 : vector<16x32xf32>
    %116 = vector.extract_strided_slice %37 {offsets = [0, 0, 24], sizes = [2, 8, 8], strides = [1, 1, 1]} : vector<2x8x32xf32> to vector<2x8x8xf32>
    %117 = vector.extract_strided_slice %39 {offsets = [0, 0, 24], sizes = [2, 8, 8], strides = [1, 1, 1]} : vector<2x8x32xf32> to vector<2x8x8xf32>
    %118 = vector.extract_strided_slice %41 {offsets = [0, 0, 24], sizes = [2, 8, 8], strides = [1, 1, 1]} : vector<2x8x32xf32> to vector<2x8x8xf32>
    "tpu.trace_start"() <{level = 10 : i32, message = "bqd,bkd->bqk"}> : () -> ()
    %cst_41 = arith.constant dense<0.000000e+00> : vector<2x8x8xf32>
    %119 = tpu.matmul %116, %117, %cst_41 {dimension_numbers = #tpu.dot_dimension_numbers<[2], [2], [1], [1], [0, 0, 0, 1, 1, 1], [0], [0]>} : vector<2x8x8xf32>, vector<2x8x8xf32>, vector<2x8x8xf32> -> vector<2x8x8xf32>
    "tpu.trace_stop"() : () -> ()
    %cst_42 = arith.constant 0.353553385 : f32
    %120 = vector.broadcast %cst_42 : f32 to vector<2x8x8xf32>
    %121 = arith.mulf %119, %120 : vector<2x8x8xf32>
    %cst_43 = arith.constant dense<0xFF800000> : vector<2x8xf32>
    %122 = vector.multi_reduction <maximumf>, %121, %cst_43 [2] : vector<2x8x8xf32> to vector<2x8xf32>
    %123 = vector.shape_cast %122 : vector<2x8xf32> to vector<2x8x1xf32>
    %124 = vector.broadcast %123 : vector<2x8x1xf32> to vector<2x8x8xf32>
    %125 = arith.subf %121, %124 : vector<2x8x8xf32>
    %126 = math.exp %125 : vector<2x8x8xf32>
    %cst_44 = arith.constant dense<0.000000e+00> : vector<2x8xf32>
    %127 = vector.multi_reduction <add>, %126, %cst_44 [2] : vector<2x8x8xf32> to vector<2x8xf32>
    %128 = vector.shape_cast %127 : vector<2x8xf32> to vector<2x8x1xf32>
    %129 = tpu.reciprocal %128 {approx = true} : vector<2x8x1xf32> -> vector<2x8x1xf32>
    %130 = vector.broadcast %129 : vector<2x8x1xf32> to vector<2x8x8xf32>
    %131 = arith.mulf %126, %130 : vector<2x8x8xf32>
    %c3 = arith.constant 3 : index
    %c0_45 = arith.constant 0 : index
    %c0_46 = arith.constant 0 : index
    %c0_47 = arith.constant 0 : index
    %132 = vector.load %arg7[%c3, %c0_45, %c0_46, %c0_47] : memref<4x2x8x8xf32, #tpu.memory_space<vmem>>, vector<1x2x8x8xf32>
    %133 = vector.shape_cast %132 : vector<1x2x8x8xf32> to vector<2x8x8xf32>
    %134 = vector.shape_cast %131 : vector<2x8x8xf32> to vector<1x2x8x8xf32>
    tpu.vector_store %arg7[%c3, %c0_45, %c0_46, %c0_47], %134 {strides = array<i32>} : memref<4x2x8x8xf32, #tpu.memory_space<vmem>>, vector<1x2x8x8xf32>,
    "tpu.trace_start"() <{level = 10 : i32, message = "bqk,bkd->bqd"}> : () -> ()
    %cst_48 = arith.constant dense<0.000000e+00> : vector<2x8x8xf32>
    %135 = tpu.matmul %131, %118, %cst_48 {dimension_numbers = #tpu.dot_dimension_numbers<[2], [1], [1], [2], [0, 0, 0, 1, 1, 2], [0], [0]>} : vector<2x8x8xf32>, vector<2x8x8xf32>, vector<2x8x8xf32> -> vector<2x8x8xf32>
    "tpu.trace_stop"() : () -> ()
    %136 = vector.shape_cast %135 : vector<2x8x8xf32> to vector<16x8xf32>
    %137 = vector.extract_strided_slice %42 {offsets = [24, 0], sizes = [8, 32], strides = [1, 1]} : vector<32x32xf32> to vector<8x32xf32>
    %cst_49 = arith.constant dense<0.000000e+00> : vector<16x32xf32>
    %138 = tpu.matmul %136, %137, %cst_49 {dimension_numbers = #tpu.dot_dimension_numbers<[1], [0], [0], [1], [0, 0, 1, 1], [], []>} : vector<16x8xf32>, vector<8x32xf32>, vector<16x32xf32> -> vector<16x32xf32>
    %139 = arith.addf %115, %138 : vector<16x32xf32>
    %140 = vector.broadcast %8 : vector<1x32xf32> to vector<16x32xf32>
    %141 = arith.addf %139, %140 : vector<16x32xf32>
    %142 = arith.addf %141, %0 : vector<16x32xf32>
    %cst_50 = arith.constant dense<0.000000e+00> : vector<16xf32>
    %143 = vector.multi_reduction <add>, %142, %cst_50 [1] : vector<16x32xf32> to vector<16xf32>
    %144 = vector.shape_cast %143 : vector<16xf32> to vector<16x1xf32>
    %cst_51 = arith.constant 3.200000e+01 : f32
    %145 = vector.broadcast %cst_51 : f32 to vector<16x1xf32>
    %146 = arith.divf %144, %145 : vector<16x1xf32>
    %147 = vector.broadcast %146 : vector<16x1xf32> to vector<16x32xf32>
    %148 = arith.subf %142, %147 : vector<16x32xf32>
    %149 = arith.mulf %148, %148 : vector<16x32xf32>
    %cst_52 = arith.constant dense<0.000000e+00> : vector<16xf32>
    %150 = vector.multi_reduction <add>, %149, %cst_52 [1] : vector<16x32xf32> to vector<16xf32>
    %151 = vector.shape_cast %150 : vector<16xf32> to vector<16x1xf32>
    %cst_53 = arith.constant 3.200000e+01 : f32
    %152 = vector.broadcast %cst_53 : f32 to vector<16x1xf32>
    %153 = arith.divf %151, %152 : vector<16x1xf32>
    %154 = vector.broadcast %146 : vector<16x1xf32> to vector<16x32xf32>
    %155 = arith.subf %142, %154 : vector<16x32xf32>
    %cst_54 = arith.constant 9.99999974E-6 : f32
    %156 = vector.broadcast %cst_54 : f32 to vector<16x1xf32>
    %157 = arith.addf %153, %156 : vector<16x1xf32>
    %158 = math.rsqrt %157 : vector<16x1xf32>
    %159 = vector.broadcast %158 : vector<16x1xf32> to vector<16x32xf32>
    %160 = arith.mulf %155, %159 : vector<16x32xf32>
    %161 = vector.broadcast %6 : vector<1x32xf32> to vector<16x32xf32>
    %162 = arith.mulf %160, %161 : vector<16x32xf32>
    %163 = vector.broadcast %7 : vector<1x32xf32> to vector<16x32xf32>
    %164 = arith.addf %162, %163 : vector<16x32xf32>
    %c0_55 = arith.constant 0 : index
    %c0_56 = arith.constant 0 : index
    %165 = vector.load %arg3[%c0_55, %c0_56] : memref<32x64xf32, #tpu.memory_space<vmem>>, vector<32x64xf32>
    %cst_57 = arith.constant dense<0.000000e+00> : vector<16x64xf32>
    %166 = tpu.matmul %164, %165, %cst_57 {dimension_numbers = #tpu.dot_dimension_numbers<[1], [0], [0], [1], [0, 0, 1, 1], [], []>} : vector<16x32xf32>, vector<32x64xf32>, vector<16x64xf32> -> vector<16x64xf32>
    %167 = vector.broadcast %3 : vector<1x64xf32> to vector<16x64xf32>
    %168 = arith.addf %166, %167 : vector<16x64xf32>
    %cst_58 = arith.constant 5.000000e-01 : f32
    %169 = vector.broadcast %cst_58 : f32 to vector<16x64xf32>
    %170 = arith.mulf %169, %168 : vector<16x64xf32>
    %cst_59 = arith.constant 0.707106769 : f32
    %171 = vector.broadcast %cst_59 : f32 to vector<16x64xf32>
    %172 = arith.mulf %168, %171 : vector<16x64xf32>
    %173 = math.erf %172 : vector<16x64xf32>
    %cst_60 = arith.constant 1.000000e+00 : f32
    %174 = vector.broadcast %cst_60 : f32 to vector<16x64xf32>
    %175 = arith.addf %174, %173 : vector<16x64xf32>
    %176 = arith.mulf %170, %175 : vector<16x64xf32>
    %c0_61 = arith.constant 0 : index
    %c0_62 = arith.constant 0 : index
    %177 = vector.load %arg4[%c0_61, %c0_62] : memref<64x32xf32, #tpu.memory_space<vmem>>, vector<64x32xf32>
    %cst_63 = arith.constant dense<0.000000e+00> : vector<16x32xf32>
    %178 = tpu.matmul %176, %177, %cst_63 {dimension_numbers = #tpu.dot_dimension_numbers<[1], [0], [0], [1], [0, 0, 1, 1], [], []>} : vector<16x64xf32>, vector<64x32xf32>, vector<16x32xf32> -> vector<16x32xf32>
    %179 = vector.broadcast %9 : vector<1x32xf32> to vector<16x32xf32>
    %180 = arith.addf %178, %179 : vector<16x32xf32>
    %181 = arith.addf %180, %142 : vector<16x32xf32>
    %c0_64 = arith.constant 0 : index
    %c0_65 = arith.constant 0 : index
    %182 = vector.load %arg6[%c0_64, %c0_65] : memref<16x32xf32, #tpu.memory_space<vmem>>, vector<16x32xf32>
    tpu.vector_store %arg6[%c0_64, %c0_65], %181 {strides = array<i32>} : memref<16x32xf32, #tpu.memory_space<vmem>>, vector<16x32xf32>,
    return
  }
}

</mosaic_0001>

<llo_original>
// kernel: transformer_encoder.1
$region0: #{transformer_encoder.1}
  #allocation0 [shape = 'u32[]', space=smem, size = 0x4, offset = 0x4, fixed_abs, tag = 'smem constant byte address 0x4 - core index']
  #allocation1 [shape = 'u32[144,128]{1,0:T(1,128)}', space=vmem, size = 0x12000, scoped, tag = 'internal scratch']
  %s0 = inlined_call_operand.vmem [shape: f32[16,32], index: 0, kind: input, shape index: {}]
  %s1 = inlined_call_operand.vmem [shape: f32[32,96], index: 1, kind: input, shape index: {}]
  %s2 = inlined_call_operand.vmem [shape: f32[32,32], index: 2, kind: input, shape index: {}]
  %s3 = inlined_call_operand.vmem [shape: f32[32,64], index: 3, kind: input, shape index: {}]
  %s4 = inlined_call_operand.vmem [shape: f32[64,32], index: 4, kind: input, shape index: {}]
  %s5 = inlined_call_operand.vmem [shape: f32[8,96], index: 5, kind: input, shape index: {}]
  %s6 = inlined_call_operand.hbm [shape: f32[16,32], index: 6, kind: output, shape index: {0}]
  %s7 = inlined_call_operand.vmem [shape: f32[4,2,8,8], index: 7, kind: output, shape index: {1}]
  %8 = xla_tuple %s6, %s7
  %s9 = sld [smem:[#allocation0]]
  $region42: #{transformer_encoder.1} parent=0
    _
  %s11 = ssub.s32 1, %s9
  %s12 = scalar_select 0, %s11, %s9
  $region1: #{transformer_encoder.1} parent=0
    #allocation2 [shape = 'u8[8192]{0}', space=vmem, size = 0x2000, scoped, tag = 'output window, operand 0, single buffered']
    #allocation3 [shape = 's32[1]{0}', space=sflag, size = 0x4, scoped, tag = 'scoped memory for transformer_encoder.1']
    %13 = vsyncpa [#allocation3], 0
    // Predicated region
    $region2: #{transformer_encoder.1} parent=1 // pred_check
      _
    $region3: #{transformer_encoder.1} parent=1 // pred_check_branch
      %15 = sbr.rel (0) target = $region5
    $region4: #{transformer_encoder.1} parent=1 // pred_region
      _
    $region5: #{transformer_encoder.1} parent=1 // pred_fallthru
      _
    // Predicated region
    $region6: #{transformer_encoder.1} parent=1 // pred_check
      _
    $region7: #{transformer_encoder.1} parent=1 // pred_check_branch
      %17 = sbr.rel (0) target = $region9
    $region8: #{transformer_encoder.1} parent=1 // pred_region
      _
    $region9: #{transformer_encoder.1} parent=1 // pred_fallthru
      _
    // Predicated region
    $region10: #{transformer_encoder.1} parent=1 // pred_check
      _
    $region11: #{transformer_encoder.1} parent=1 // pred_check_branch
      %19 = sbr.rel (0) target = $region13
    $region12: #{transformer_encoder.1} parent=1 // pred_region
      _
    $region13: #{transformer_encoder.1} parent=1 // pred_fallthru
      _
    // Predicated region
    $region14: #{transformer_encoder.1} parent=1 // pred_check
      _
    $region15: #{transformer_encoder.1} parent=1 // pred_check_branch
      %21 = sbr.rel (0) target = $region17
    $region16: #{transformer_encoder.1} parent=1 // pred_region
      _
    $region17: #{transformer_encoder.1} parent=1 // pred_fallthru
      _
    // Predicated region
    $region18: #{transformer_encoder.1} parent=1 // pred_check
      _
    $region19: #{transformer_encoder.1} parent=1 // pred_check_branch
      %23 = sbr.rel (0) target = $region21
    $region20: #{transformer_encoder.1} parent=1 // pred_region
      _
    $region21: #{transformer_encoder.1} parent=1 // pred_fallthru
      _
    // Predicated region
    $region22: #{transformer_encoder.1} parent=1 // pred_check
      _
    $region23: #{transformer_encoder.1} parent=1 // pred_check_branch
      %25 = sbr.rel (0) target = $region25
    $region24: #{transformer_encoder.1} parent=1 // pred_region
      _
    $region25: #{transformer_encoder.1} parent=1 // pred_fallthru
      _
    %v26 = vld [vmem:[%s0] sm:$0xff]
    %v27 = vld [vmem:[%s0 + $0x8] sm:$0xff]
    %v28 = vld [vmem:[%s5] sm:$0xff]
    %vm29 = vcmask 261120
    %v30 = vsel %vm29, %v26, 0.0
    %31 = vadd.xlane.f32.xlu0 %v30
    %v32 = vpop.xlane.xlu0 %31
    %v33 = vsel %vm29, %v27, 0.0
    %34 = vadd.xlane.f32.xlu0 %v33
    %v35 = vpop.xlane.xlu0 %34
    %v36 = vrcp.pop 32.0
    %v37 = vmul.f32 %v32, %v36
    %v38 = vmul.f32 %v35, %v36
    %v39 = vsub.f32 %v26, %v37
    %v40 = vsub.f32 %v27, %v38
    %v41 = vmul.f32 %v39, %v39
    %v42 = vmul.f32 %v40, %v40
    %v43 = vsel %vm29, %v41, 0.0
    %44 = vadd.xlane.f32.xlu0 %v43
    %v45 = vpop.xlane.xlu0 %44
    %v46 = vsel %vm29, %v42, 0.0
    %47 = vadd.xlane.f32.xlu0 %v46
    %v48 = vpop.xlane.xlu0 %47
    %v49 = vmul.f32 %v45, %v36
    %v50 = vmul.f32 %v48, %v36
    %v51 = vadd.f32 %v49, 1e-05
    %v52 = vadd.f32 %v50, 1e-05
    %v53 = vrsqrt.pop %v51
    %v54 = vrsqrt.pop %v52
    %v55 = vmul.f32 %v39, %v53
    %v56 = vmul.f32 %v40, %v54
    %v57 = vlaneseq
    %v58 = vshrl.u32 %v57, 7
    %v59 = vsub.s32 2, %v58
    %v60 = vrot.slane %v28, %v59
    %v61 = vmul.f32 %v55, %v60
    %v62 = vmul.f32 %v56, %v60
    %v63 = vlaneseq
    %v64 = vshrl.u32 %v63, 7
    %v65 = vsub.s32 3, %v64
    %v66 = vrot.slane %v28, %v65
    %v67 = vadd.f32 %v61, %v66
    %v68 = vadd.f32 %v62, %v66
    %v69 = vld [vmem:[%s1] sm:$0xff]
    %v70 = vld [vmem:[%s1 + $0x8] sm:$0xff]
    %v71 = vld [vmem:[%s1 + $0x10] sm:$0xff]
    %v72 = vld [vmem:[%s1 + $0x18] sm:$0xff]
    %v73 = vlaneseq
    %v74 = vshrl.u32 %v73, 7
    %v75 = vsub.s32 0, %v74
    %v76 = vrot.slane %v28, %v75
    %v78 = vsel %vm29, %v67, 0
    %v81 = vsel %vm29, %v68, 0
    %83 = vmatprep.subr.mxu0 0.0
    %84 = vmatpush1.msra.mxu0 0.0
    %85 = vmatprep.subr.mxu0 0.0
    %86 = vmatpush1.msra.mxu0 0.0
    %87 = vmatprep.subr.mxu0 0.0
    %88 = vmatpush1.msra.mxu0 0.0
    %89 = vmatprep.subr.mxu0 0.0
    %90 = vmatpush1.msra.mxu0 0.0
    %91 = vmatprep.subr.mxu0 0.0
    %92 = vmatpush1.msra.mxu0 0.0
    %93 = vmatprep.subr.mxu0 0.0
    %94 = vmatpush1.msra.mxu0 0.0
    %95 = vmatprep.subr.mxu0 0.0
    %96 = vmatpush1.msra.mxu0 0.0
    %97 = vmatprep.subr.mxu0 0.0
    %98 = vmatpush1.msra.mxu0 0.0
    %99 = vmatprep.subr.mxu0 0.0
    %100 = vmatpush1.msra.mxu0 0.0
    %101 = vmatprep.subr.mxu0 0.0
    %102 = vmatpush1.msra.mxu0 0.0
    %103 = vmatprep.subr.mxu0 0.0
    %104 = vmatpush1.msra.mxu0 0.0
    %105 = vmatprep.subr.mxu0 0.0
    %106 = vmatpush1.msra.mxu0 0.0
    %107 = vmatprep.subr.mxu0 0.0
    %108 = vmatpush1.msra.mxu0 %v72
    %109 = vmatprep.subr.mxu0 0.0
    %110 = vmatpush1.msra.mxu0 %v71
    %111 = vmatprep.subr.mxu0 0.0
    %112 = vmatpush1.msra.mxu0 %v70
    %113 = vmatprep.subr.mxu0 0.0
    %114 = vmatpush1.msra.mxu0 %v69
    %115 = vmatprep.subr.mxu0 0.0
    %116 = vmatpush2.msra.mxu0 0.0
    %117 = vmatprep.subr.mxu0 0.0
    %118 = vmatpush2.msra.mxu0 0.0
    %119 = vmatprep.subr.mxu0 0.0
    %120 = vmatpush2.msra.mxu0 0.0
    %121 = vmatprep.subr.mxu0 0.0
    %122 = vmatpush2.msra.mxu0 0.0
    %123 = vmatprep.subr.mxu0 0.0
    %124 = vmatpush2.msra.mxu0 0.0
    %125 = vmatprep.subr.mxu0 0.0
    %126 = vmatpush2.msra.mxu0 0.0
    %127 = vmatprep.subr.mxu0 0.0
    %128 = vmatpush2.msra.mxu0 0.0
    %129 = vmatprep.subr.mxu0 0.0
    %130 = vmatpush2.msra.mxu0 0.0
    %131 = vmatprep.subr.mxu0 0.0
    %132 = vmatpush2.msra.mxu0 0.0
    %133 = vmatprep.subr.mxu0 0.0
    %134 = vmatpush2.msra.mxu0 0.0
    %135 = vmatprep.subr.mxu0 0.0
    %136 = vmatpush2.msra.mxu0 0.0
    %137 = vmatprep.subr.mxu0 0.0
    %138 = vmatpush2.msra.mxu0 0.0
    %139 = vmatprep.subr.mxu0 0.0
    %140 = vmatpush2.msra.mxu0 0.0
    %141 = vmatprep.subr.mxu0 0.0
    %142 = vmatpush2.msra.mxu0 0.0
    %143 = vmatprep.subr.mxu0 0.0
    %144 = vmatpush2.msra.mxu0 0.0
    %145 = vmatprep.subr.mxu0 0.0
    %146 = vmatpush2.msra.mxu0 0.0
    %147 = vmatprep.mubr.f32.mxu0 0.0
    %148 = vmatmul.mubr.f32.gmra.mxu0 %v78
    %v149 = vpop.f32.mrf.mxu0
    %v150 = vadd.f32 %v76, %v149
    %v151 = vpop.f32.mrf.mxu0
    %152 = vmatprep.mubr.f32.mxu0 0.0
    %153 = vmatmul.mubr.f32.gmra.mxu0 %v81
    %v154 = vpop.f32.mrf.mxu0
    %v155 = vadd.f32 %v76, %v154
    %v156 = vpop.f32.mrf.mxu0
    %157 = vdwg.mxu0
    %v158 = vld [vmem:[%s2] sm:$0xff]
    %v159 = vld [vmem:[%s2 + $0x8] sm:$0xff]
    %v160 = vld [vmem:[%s2 + $0x10] sm:$0xff]
    %v161 = vld [vmem:[%s2 + $0x18] sm:$0xff]
    %163 = vrot.lane.b32.xlu0 %v150, 96
    %v164 = vpop.permute.xlu0 %163
    %vm165 = vcmask 64512
    %v166 = vsel %vm165, %v150, 0
    %v168 = vsel %vm165, %v164, 0
    %170 = vmatprep.subr.mxu0 0.0
    %171 = vmatpush1.xpose.msra.mxu0 0.0
    %172 = vmatprep.subr.mxu0 0.0
    %173 = vmatpush1.xpose.msra.mxu0 0.0
    %174 = vmatprep.subr.mxu0 0.0
    %175 = vmatpush1.xpose.msra.mxu0 0.0
    %176 = vmatprep.subr.mxu0 0.0
    %177 = vmatpush1.xpose.msra.mxu0 0.0
    %178 = vmatprep.subr.mxu0 0.0
    %179 = vmatpush1.xpose.msra.mxu0 0.0
    %180 = vmatprep.subr.mxu0 0.0
    %181 = vmatpush1.xpose.msra.mxu0 0.0
    %182 = vmatprep.subr.mxu0 0.0
    %183 = vmatpush1.xpose.msra.mxu0 0.0
    %184 = vmatprep.subr.mxu0 0.0
    %185 = vmatpush1.xpose.msra.mxu0 0.0
    %186 = vmatprep.subr.mxu0 0.0
    %187 = vmatpush1.xpose.msra.mxu0 0.0
    %188 = vmatprep.subr.mxu0 0.0
    %189 = vmatpush1.xpose.msra.mxu0 0.0
    %190 = vmatprep.subr.mxu0 0.0
    %191 = vmatpush1.xpose.msra.mxu0 0.0
    %192 = vmatprep.subr.mxu0 0.0
    %193 = vmatpush1.xpose.msra.mxu0 0.0
    %194 = vmatprep.subr.mxu0 0.0
    %195 = vmatpush1.xpose.msra.mxu0 0.0
    %196 = vmatprep.subr.mxu0 0.0
    %197 = vmatpush1.xpose.msra.mxu0 0.0
    %198 = vmatprep.subr.mxu0 0.0
    %199 = vmatpush1.xpose.msra.mxu0 0.0
    %200 = vmatprep.subr.mxu0 0.0
    %201 = vmatpush1.xpose.msra.mxu0 %v168
    %202 = vmatprep.subr.mxu0 0.0
    %203 = vmatpush2.xpose.msra.mxu0 0.0
    %204 = vmatprep.subr.mxu0 0.0
    %205 = vmatpush2.xpose.msra.mxu0 0.0
    %206 = vmatprep.subr.mxu0 0.0
    %207 = vmatpush2.xpose.msra.mxu0 0.0
    %208 = vmatprep.subr.mxu0 0.0
    %209 = vmatpush2.xpose.msra.mxu0 0.0
    %210 = vmatprep.subr.mxu0 0.0
    %211 = vmatpush2.xpose.msra.mxu0 0.0
    %212 = vmatprep.subr.mxu0 0.0
    %213 = vmatpush2.xpose.msra.mxu0 0.0
    %214 = vmatprep.subr.mxu0 0.0
    %215 = vmatpush2.xpose.msra.mxu0 0.0
    %216 = vmatprep.subr.mxu0 0.0
    %217 = vmatpush2.xpose.msra.mxu0 0.0
    %218 = vmatprep.subr.mxu0 0.0
    %219 = vmatpush2.xpose.msra.mxu0 0.0
    %220 = vmatprep.subr.mxu0 0.0
    %221 = vmatpush2.xpose.msra.mxu0 0.0
    %222 = vmatprep.subr.mxu0 0.0
    %223 = vmatpush2.xpose.msra.mxu0 0.0
    %224 = vmatprep.subr.mxu0 0.0
    %225 = vmatpush2.xpose.msra.mxu0 0.0
    %226 = vmatprep.subr.mxu0 0.0
    %227 = vmatpush2.xpose.msra.mxu0 0.0
    %228 = vmatprep.subr.mxu0 0.0
    %229 = vmatpush2.xpose.msra.mxu0 0.0
    %230 = vmatprep.subr.mxu0 0.0
    %231 = vmatpush2.xpose.msra.mxu0 0.0
    %232 = vmatprep.subr.mxu0 0.0
    %233 = vmatpush2.xpose.msra.mxu0 0.0
    %234 = vmatprep.mubr.f32.mxu0 0.0
    %235 = vmatmul.mubr.f32.gmra.mxu0 %v166
    %v236 = vpop.f32.mrf.mxu0
    %v237 = vadd.f32 0.0, %v236
    %v238 = vpop.f32.mrf.mxu0
    %239 = vdwg.mxu0
    %241 = vrot.lane.b32.xlu0 %v155, 96
    %v242 = vpop.permute.xlu0 %241
    %v243 = vsel %vm165, %v155, 0
    %v245 = vsel %vm165, %v242, 0
    %247 = vmatprep.subr.mxu0 0.0
    %248 = vmatpush1.xpose.msra.mxu0 0.0
    %249 = vmatprep.subr.mxu0 0.0
    %250 = vmatpush1.xpose.msra.mxu0 0.0
    %251 = vmatprep.subr.mxu0 0.0
    %252 = vmatpush1.xpose.msra.mxu0 0.0
    %253 = vmatprep.subr.mxu0 0.0
    %254 = vmatpush1.xpose.msra.mxu0 0.0
    %255 = vmatprep.subr.mxu0 0.0
    %256 = vmatpush1.xpose.msra.mxu0 0.0
    %257 = vmatprep.subr.mxu0 0.0
    %258 = vmatpush1.xpose.msra.mxu0 0.0
    %259 = vmatprep.subr.mxu0 0.0
    %260 = vmatpush1.xpose.msra.mxu0 0.0
    %261 = vmatprep.subr.mxu0 0.0
    %262 = vmatpush1.xpose.msra.mxu0 0.0
    %263 = vmatprep.subr.mxu0 0.0
    %264 = vmatpush1.xpose.msra.mxu0 0.0
    %265 = vmatprep.subr.mxu0 0.0
    %266 = vmatpush1.xpose.msra.mxu0 0.0
    %267 = vmatprep.subr.mxu0 0.0
    %268 = vmatpush1.xpose.msra.mxu0 0.0
    %269 = vmatprep.subr.mxu0 0.0
    %270 = vmatpush1.xpose.msra.mxu0 0.0
    %271 = vmatprep.subr.mxu0 0.0
    %272 = vmatpush1.xpose.msra.mxu0 0.0
    %273 = vmatprep.subr.mxu0 0.0
    %274 = vmatpush1.xpose.msra.mxu0 0.0
    %275 = vmatprep.subr.mxu0 0.0
    %276 = vmatpush1.xpose.msra.mxu0 0.0
    %277 = vmatprep.subr.mxu0 0.0
    %278 = vmatpush1.xpose.msra.mxu0 %v245
    %279 = vmatprep.subr.mxu0 0.0
    %280 = vmatpush2.xpose.msra.mxu0 0.0
    %281 = vmatprep.subr.mxu0 0.0
    %282 = vmatpush2.xpose.msra.mxu0 0.0
    %283 = vmatprep.subr.mxu0 0.0
    %284 = vmatpush2.xpose.msra.mxu0 0.0
    %285 = vmatprep.subr.mxu0 0.0
    %286 = vmatpush2.xpose.msra.mxu0 0.0
    %287 = vmatprep.subr.mxu0 0.0
    %288 = vmatpush2.xpose.msra.mxu0 0.0
    %289 = vmatprep.subr.mxu0 0.0
    %290 = vmatpush2.xpose.msra.mxu0 0.0
    %291 = vmatprep.subr.mxu0 0.0
    %292 = vmatpush2.xpose.msra.mxu0 0.0
    %293 = vmatprep.subr.mxu0 0.0
    %294 = vmatpush2.xpose.msra.mxu0 0.0
    %295 = vmatprep.subr.mxu0 0.0
    %296 = vmatpush2.xpose.msra.mxu0 0.0
    %297 = vmatprep.subr.mxu0 0.0
    %298 = vmatpush2.xpose.msra.mxu0 0.0
    %299 = vmatprep.subr.mxu0 0.0
    %300 = vmatpush2.xpose.msra.mxu0 0.0
    %301 = vmatprep.subr.mxu0 0.0
    %302 = vmatpush2.xpose.msra.mxu0 0.0
    %303 = vmatprep.subr.mxu0 0.0
    %304 = vmatpush2.xpose.msra.mxu0 0.0
    %305 = vmatprep.subr.mxu0 0.0
    %306 = vmatpush2.xpose.msra.mxu0 0.0
    %307 = vmatprep.subr.mxu0 0.0
    %308 = vmatpush2.xpose.msra.mxu0 0.0
    %309 = vmatprep.subr.mxu0 0.0
    %310 = vmatpush2.xpose.msra.mxu0 0.0
    %311 = vmatprep.mubr.f32.mxu0 0.0
    %312 = vmatmul.mubr.f32.gmra.mxu0 %v243
    %v313 = vpop.f32.mrf.mxu0
    %v314 = vadd.f32 0.0, %v313
    %v315 = vpop.f32.mrf.mxu0
    %316 = vdwg.mxu0
    %v317 = vmul.f32 %v237, 0.35355338
    %v318 = vmul.f32 %v314, 0.35355338
    %v319 = vsel %vm165, %v317, -inf
    %320 = vmax.xlane.f32.xlu0 %v319
    %v321 = vpop.xlane.xlu0 %320
    %v322 = vsel %vm165, %v318, -inf
    %323 = vmax.xlane.f32.xlu0 %v322
    %v324 = vpop.xlane.xlu0 %323
    %v325 = vsub.f32 %v317, %v321
    %v326 = vsub.f32 %v318, %v324
    %v327 = vmul.f32 %v325, 1.442695
    %v328 = vpow.pop %v327
    %v329 = vmul.f32 %v326, 1.442695
    %v330 = vpow.pop %v329
    %v331 = vsel %vm165, %v328, 0.0
    %332 = vadd.xlane.f32.xlu0 %v331
    %v333 = vpop.xlane.xlu0 %332
    %v334 = vsel %vm165, %v330, 0.0
    %335 = vadd.xlane.f32.xlu0 %v334
    %v336 = vpop.xlane.xlu0 %335
    %v337 = vrcp.pop %v333
    %v338 = vrcp.pop %v336
    %v339 = vmul.f32 %v328, %v337
    %v340 = vmul.f32 %v330, %v338
    %341 = vst.msk [vmem:[%s7] sm:$0xff] %vm165, %v339
    %342 = vst.msk [vmem:[%s7 + $0x8] sm:$0xff] %vm165, %v340
    %343 = vrot.lane.b32.xlu0 %v150, 64
    %v344 = vpop.permute.xlu0 %343
    %v347 = vsel %vm165, %v339, 0
    %349 = vmatprep.subr.mxu0 0.0
    %350 = vmatpush1.msra.mxu0 0.0
    %351 = vmatprep.subr.mxu0 0.0
    %352 = vmatpush1.msra.mxu0 0.0
    %353 = vmatprep.subr.mxu0 0.0
    %354 = vmatpush1.msra.mxu0 0.0
    %355 = vmatprep.subr.mxu0 0.0
    %356 = vmatpush1.msra.mxu0 0.0
    %357 = vmatprep.subr.mxu0 0.0
    %358 = vmatpush1.msra.mxu0 0.0
    %359 = vmatprep.subr.mxu0 0.0
    %360 = vmatpush1.msra.mxu0 0.0
    %361 = vmatprep.subr.mxu0 0.0
    %362 = vmatpush1.msra.mxu0 0.0
    %363 = vmatprep.subr.mxu0 0.0
    %364 = vmatpush1.msra.mxu0 0.0
    %365 = vmatprep.subr.mxu0 0.0
    %366 = vmatpush1.msra.mxu0 0.0
    %367 = vmatprep.subr.mxu0 0.0
    %368 = vmatpush1.msra.mxu0 0.0
    %369 = vmatprep.subr.mxu0 0.0
    %370 = vmatpush1.msra.mxu0 0.0
    %371 = vmatprep.subr.mxu0 0.0
    %372 = vmatpush1.msra.mxu0 0.0
    %373 = vmatprep.subr.mxu0 0.0
    %374 = vmatpush1.msra.mxu0 0.0
    %375 = vmatprep.subr.mxu0 0.0
    %376 = vmatpush1.msra.mxu0 0.0
    %377 = vmatprep.subr.mxu0 0.0
    %378 = vmatpush1.msra.mxu0 0.0
    %379 = vmatprep.subr.mxu0 0.0
    %380 = vmatpush1.msra.mxu0 %v344
    %381 = vmatprep.subr.mxu0 0.0
    %382 = vmatpush2.msra.mxu0 0.0
    %383 = vmatprep.subr.mxu0 0.0
    %384 = vmatpush2.msra.mxu0 0.0
    %385 = vmatprep.subr.mxu0 0.0
    %386 = vmatpush2.msra.mxu0 0.0
    %387 = vmatprep.subr.mxu0 0.0
    %388 = vmatpush2.msra.mxu0 0.0
    %389 = vmatprep.subr.mxu0 0.0
    %390 = vmatpush2.msra.mxu0 0.0
    %391 = vmatprep.subr.mxu0 0.0
    %392 = vmatpush2.msra.mxu0 0.0
    %393 = vmatprep.subr.mxu0 0.0
    %394 = vmatpush2.msra.mxu0 0.0
    %395 = vmatprep.subr.mxu0 0.0
    %396 = vmatpush2.msra.mxu0 0.0
    %397 = vmatprep.subr.mxu0 0.0
    %398 = vmatpush2.msra.mxu0 0.0
    %399 = vmatprep.subr.mxu0 0.0
    %400 = vmatpush2.msra.mxu0 0.0
    %401 = vmatprep.subr.mxu0 0.0
    %402 = vmatpush2.msra.mxu0 0.0
    %403 = vmatprep.subr.mxu0 0.0
    %404 = vmatpush2.msra.mxu0 0.0
    %405 = vmatprep.subr.mxu0 0.0
    %406 = vmatpush2.msra.mxu0 0.0
    %407 = vmatprep.subr.mxu0 0.0
    %408 = vmatpush2.msra.mxu0 0.0
    %409 = vmatprep.subr.mxu0 0.0
    %410 = vmatpush2.msra.mxu0 0.0
    %411 = vmatprep.subr.mxu0 0.0
    %412 = vmatpush2.msra.mxu0 0.0
    %413 = vmatprep.mubr.f32.mxu0 0.0
    %414 = vmatmul.mubr.f32.gmra.mxu0 %v347
    %v415 = vpop.f32.mrf.mxu0
    %v416 = vadd.f32 0.0, %v415
    %v417 = vpop.f32.mrf.mxu0
    %418 = vdwg.mxu0
    %419 = vrot.lane.b32.xlu0 %v155, 64
    %v420 = vpop.permute.xlu0 %419
    %v423 = vsel %vm165, %v340, 0
    %425 = vmatprep.subr.mxu0 0.0
    %426 = vmatpush1.msra.mxu0 0.0
    %427 = vmatprep.subr.mxu0 0.0
    %428 = vmatpush1.msra.mxu0 0.0
    %429 = vmatprep.subr.mxu0 0.0
    %430 = vmatpush1.msra.mxu0 0.0
    %431 = vmatprep.subr.mxu0 0.0
    %432 = vmatpush1.msra.mxu0 0.0
    %433 = vmatprep.subr.mxu0 0.0
    %434 = vmatpush1.msra.mxu0 0.0
    %435 = vmatprep.subr.mxu0 0.0
    %436 = vmatpush1.msra.mxu0 0.0
    %437 = vmatprep.subr.mxu0 0.0
    %438 = vmatpush1.msra.mxu0 0.0
    %439 = vmatprep.subr.mxu0 0.0
    %440 = vmatpush1.msra.mxu0 0.0
    %441 = vmatprep.subr.mxu0 0.0
    %442 = vmatpush1.msra.mxu0 0.0
    %443 = vmatprep.subr.mxu0 0.0
    %444 = vmatpush1.msra.mxu0 0.0
    %445 = vmatprep.subr.mxu0 0.0
    %446 = vmatpush1.msra.mxu0 0.0
    %447 = vmatprep.subr.mxu0 0.0
    %448 = vmatpush1.msra.mxu0 0.0
    %449 = vmatprep.subr.mxu0 0.0
    %450 = vmatpush1.msra.mxu0 0.0
    %451 = vmatprep.subr.mxu0 0.0
    %452 = vmatpush1.msra.mxu0 0.0
    %453 = vmatprep.subr.mxu0 0.0
    %454 = vmatpush1.msra.mxu0 0.0
    %455 = vmatprep.subr.mxu0 0.0
    %456 = vmatpush1.msra.mxu0 %v420
    %457 = vmatprep.subr.mxu0 0.0
    %458 = vmatpush2.msra.mxu0 0.0
    %459 = vmatprep.subr.mxu0 0.0
    %460 = vmatpush2.msra.mxu0 0.0
    %461 = vmatprep.subr.mxu0 0.0
    %462 = vmatpush2.msra.mxu0 0.0
    %463 = vmatprep.subr.mxu0 0.0
    %464 = vmatpush2.msra.mxu0 0.0
    %465 = vmatprep.subr.mxu0 0.0
    %466 = vmatpush2.msra.mxu0 0.0
    %467 = vmatprep.subr.mxu0 0.0
    %468 = vmatpush2.msra.mxu0 0.0
    %469 = vmatprep.subr.mxu0 0.0
    %470 = vmatpush2.msra.mxu0 0.0
    %471 = vmatprep.subr.mxu0 0.0
    %472 = vmatpush2.msra.mxu0 0.0
    %473 = vmatprep.subr.mxu0 0.0
    %474 = vmatpush2.msra.mxu0 0.0
    %475 = vmatprep.subr.mxu0 0.0
    %476 = vmatpush2.msra.mxu0 0.0
    %477 = vmatprep.subr.mxu0 0.0
    %478 = vmatpush2.msra.mxu0 0.0
    %479 = vmatprep.subr.mxu0 0.0
    %480 = vmatpush2.msra.mxu0 0.0
    %481 = vmatprep.subr.mxu0 0.0
    %482 = vmatpush2.msra.mxu0 0.0
    %483 = vmatprep.subr.mxu0 0.0
    %484 = vmatpush2.msra.mxu0 0.0
    %485 = vmatprep.subr.mxu0 0.0
    %486 = vmatpush2.msra.mxu0 0.0
    %487 = vmatprep.subr.mxu0 0.0
    %488 = vmatpush2.msra.mxu0 0.0
    %489 = vmatprep.mubr.f32.mxu0 0.0
    %490 = vmatmul.mubr.f32.gmra.mxu0 %v423
    %v491 = vpop.f32.mrf.mxu0
    %v492 = vadd.f32 0.0, %v491
    %v493 = vpop.f32.mrf.mxu0
    %494 = vdwg.mxu0
    %495 = vrot.lane.b32.xlu0 %v150, 120
    %v496 = vpop.permute.xlu0 %495
    %497 = vrot.lane.b32.xlu0 %v150, 88
    %v498 = vpop.permute.xlu0 %497
    %v499 = vsel %vm165, %v496, 0
    %v501 = vsel %vm165, %v498, 0
    %503 = vmatprep.subr.mxu0 0.0
    %504 = vmatpush1.xpose.msra.mxu0 0.0
    %505 = vmatprep.subr.mxu0 0.0
    %506 = vmatpush1.xpose.msra.mxu0 0.0
    %507 = vmatprep.subr.mxu0 0.0
    %508 = vmatpush1.xpose.msra.mxu0 0.0
    %509 = vmatprep.subr.mxu0 0.0
    %510 = vmatpush1.xpose.msra.mxu0 0.0
    %511 = vmatprep.subr.mxu0 0.0
    %512 = vmatpush1.xpose.msra.mxu0 0.0
    %513 = vmatprep.subr.mxu0 0.0
    %514 = vmatpush1.xpose.msra.mxu0 0.0
    %515 = vmatprep.subr.mxu0 0.0
    %516 = vmatpush1.xpose.msra.mxu0 0.0
    %517 = vmatprep.subr.mxu0 0.0
    %518 = vmatpush1.xpose.msra.mxu0 0.0
    %519 = vmatprep.subr.mxu0 0.0
    %520 = vmatpush1.xpose.msra.mxu0 0.0
    %521 = vmatprep.subr.mxu0 0.0
    %522 = vmatpush1.xpose.msra.mxu0 0.0
    %523 = vmatprep.subr.mxu0 0.0
    %524 = vmatpush1.xpose.msra.mxu0 0.0
    %525 = vmatprep.subr.mxu0 0.0
    %526 = vmatpush1.xpose.msra.mxu0 0.0
    %527 = vmatprep.subr.mxu0 0.0
    %528 = vmatpush1.xpose.msra.mxu0 0.0
    %529 = vmatprep.subr.mxu0 0.0
    %530 = vmatpush1.xpose.msra.mxu0 0.0
    %531 = vmatprep.subr.mxu0 0.0
    %532 = vmatpush1.xpose.msra.mxu0 0.0
    %533 = vmatprep.subr.mxu0 0.0
    %534 = vmatpush1.xpose.msra.mxu0 %v501
    %535 = vmatprep.subr.mxu0 0.0
    %536 = vmatpush2.xpose.msra.mxu0 0.0
    %537 = vmatprep.subr.mxu0 0.0
    %538 = vmatpush2.xpose.msra.mxu0 0.0
    %539 = vmatprep.subr.mxu0 0.0
    %540 = vmatpush2.xpose.msra.mxu0 0.0
    %541 = vmatprep.subr.mxu0 0.0
    %542 = vmatpush2.xpose.msra.mxu0 0.0
    %543 = vmatprep.subr.mxu0 0.0
    %544 = vmatpush2.xpose.msra.mxu0 0.0
    %545 = vmatprep.subr.mxu0 0.0
    %546 = vmatpush2.xpose.msra.mxu0 0.0
    %547 = vmatprep.subr.mxu0 0.0
    %548 = vmatpush2.xpose.msra.mxu0 0.0
    %549 = vmatprep.subr.mxu0 0.0
    %550 = vmatpush2.xpose.msra.mxu0 0.0
    %551 = vmatprep.subr.mxu0 0.0
    %552 = vmatpush2.xpose.msra.mxu0 0.0
    %553 = vmatprep.subr.mxu0 0.0
    %554 = vmatpush2.xpose.msra.mxu0 0.0
    %555 = vmatprep.subr.mxu0 0.0
    %556 = vmatpush2.xpose.msra.mxu0 0.0
    %557 = vmatprep.subr.mxu0 0.0
    %558 = vmatpush2.xpose.msra.mxu0 0.0
    %559 = vmatprep.subr.mxu0 0.0
    %560 = vmatpush2.xpose.msra.mxu0 0.0
    %561 = vmatprep.subr.mxu0 0.0
    %562 = vmatpush2.xpose.msra.mxu0 0.0
    %563 = vmatprep.subr.mxu0 0.0
    %564 = vmatpush2.xpose.msra.mxu0 0.0
    %565 = vmatprep.subr.mxu0 0.0
    %566 = vmatpush2.xpose.msra.mxu0 0.0
    %567 = vmatprep.mubr.f32.mxu0 0.0
    %568 = vmatmul.mubr.f32.gmra.mxu0 %v499
    %v569 = vpop.f32.mrf.mxu0
    %v570 = vadd.f32 0.0, %v569
    %v571 = vpop.f32.mrf.mxu0
    %572 = vdwg.mxu0
    %573 = vrot.lane.b32.xlu0 %v155, 120
    %v574 = vpop.permute.xlu0 %573
    %575 = vrot.lane.b32.xlu0 %v155, 88
    %v576 = vpop.permute.xlu0 %575
    %v577 = vsel %vm165, %v574, 0
    %v579 = vsel %vm165, %v576, 0
    %581 = vmatprep.subr.mxu0 0.0
    %582 = vmatpush1.xpose.msra.mxu0 0.0
    %583 = vmatprep.subr.mxu0 0.0
    %584 = vmatpush1.xpose.msra.mxu0 0.0
    %585 = vmatprep.subr.mxu0 0.0
    %586 = vmatpush1.xpose.msra.mxu0 0.0
    %587 = vmatprep.subr.mxu0 0.0
    %588 = vmatpush1.xpose.msra.mxu0 0.0
    %589 = vmatprep.subr.mxu0 0.0
    %590 = vmatpush1.xpose.msra.mxu0 0.0
    %591 = vmatprep.subr.mxu0 0.0
    %592 = vmatpush1.xpose.msra.mxu0 0.0
    %593 = vmatprep.subr.mxu0 0.0
    %594 = vmatpush1.xpose.msra.mxu0 0.0
    %595 = vmatprep.subr.mxu0 0.0
    %596 = vmatpush1.xpose.msra.mxu0 0.0
    %597 = vmatprep.subr.mxu0 0.0
    %598 = vmatpush1.xpose.msra.mxu0 0.0
    %599 = vmatprep.subr.mxu0 0.0
    %600 = vmatpush1.xpose.msra.mxu0 0.0
    %601 = vmatprep.subr.mxu0 0.0
    %602 = vmatpush1.xpose.msra.mxu0 0.0
    %603 = vmatprep.subr.mxu0 0.0
    %604 = vmatpush1.xpose.msra.mxu0 0.0
    %605 = vmatprep.subr.mxu0 0.0
    %606 = vmatpush1.xpose.msra.mxu0 0.0
    %607 = vmatprep.subr.mxu0 0.0
    %608 = vmatpush1.xpose.msra.mxu0 0.0
    %609 = vmatprep.subr.mxu0 0.0
    %610 = vmatpush1.xpose.msra.mxu0 0.0
    %611 = vmatprep.subr.mxu0 0.0
    %612 = vmatpush1.xpose.msra.mxu0 %v579
    %613 = vmatprep.subr.mxu0 0.0
    %614 = vmatpush2.xpose.msra.mxu0 0.0
    %615 = vmatprep.subr.mxu0 0.0
    %616 = vmatpush2.xpose.msra.mxu0 0.0
    %617 = vmatprep.subr.mxu0 0.0
    %618 = vmatpush2.xpose.msra.mxu0 0.0
    %619 = vmatprep.subr.mxu0 0.0
    %620 = vmatpush2.xpose.msra.mxu0 0.0
    %621 = vmatprep.subr.mxu0 0.0
    %622 = vmatpush2.xpose.msra.mxu0 0.0
    %623 = vmatprep.subr.mxu0 0.0
    %624 = vmatpush2.xpose.msra.mxu0 0.0
    %625 = vmatprep.subr.mxu0 0.0
    %626 = vmatpush2.xpose.msra.mxu0 0.0
    %627 = vmatprep.subr.mxu0 0.0
    %628 = vmatpush2.xpose.msra.mxu0 0.0
    %629 = vmatprep.subr.mxu0 0.0
    %630 = vmatpush2.xpose.msra.mxu0 0.0
    %631 = vmatprep.subr.mxu0 0.0
    %632 = vmatpush2.xpose.msra.mxu0 0.0
    %633 = vmatprep.subr.mxu0 0.0
    %634 = vmatpush2.xpose.msra.mxu0 0.0
    %635 = vmatprep.subr.mxu0 0.0
    %636 = vmatpush2.xpose.msra.mxu0 0.0
    %637 = vmatprep.subr.mxu0 0.0
    %638 = vmatpush2.xpose.msra.mxu0 0.0
    %639 = vmatprep.subr.mxu0 0.0
    %640 = vmatpush2.xpose.msra.mxu0 0.0
    %641 = vmatprep.subr.mxu0 0.0
    %642 = vmatpush2.xpose.msra.mxu0 0.0
    %643 = vmatprep.subr.mxu0 0.0
    %644 = vmatpush2.xpose.msra.mxu0 0.0
    %645 = vmatprep.mubr.f32.mxu0 0.0
    %646 = vmatmul.mubr.f32.gmra.mxu0 %v577
    %v647 = vpop.f32.mrf.mxu0
    %v648 = vadd.f32 0.0, %v647
    %v649 = vpop.f32.mrf.mxu0
    %650 = vdwg.mxu0
    %v651 = vmul.f32 %v570, 0.35355338
    %v652 = vmul.f32 %v648, 0.35355338
    %v653 = vsel %vm165, %v651, -inf
    %654 = vmax.xlane.f32.xlu0 %v653
    %v655 = vpop.xlane.xlu0 %654
    %v656 = vsel %vm165, %v652, -inf
    %657 = vmax.xlane.f32.xlu0 %v656
    %v658 = vpop.xlane.xlu0 %657
    %v659 = vsub.f32 %v651, %v655
    %v660 = vsub.f32 %v652, %v658
    %v661 = vmul.f32 %v659, 1.442695
    %v662 = vpow.pop %v661
    %v663 = vmul.f32 %v660, 1.442695
    %v664 = vpow.pop %v663
    %v665 = vsel %vm165, %v662, 0.0
    %666 = vadd.xlane.f32.xlu0 %v665
    %v667 = vpop.xlane.xlu0 %666
    %v668 = vsel %vm165, %v664, 0.0
    %669 = vadd.xlane.f32.xlu0 %v668
    %v670 = vpop.xlane.xlu0 %669
    %v671 = vrcp.pop %v667
    %v672 = vrcp.pop %v670
    %v673 = vmul.f32 %v662, %v671
    %v674 = vmul.f32 %v664, %v672
    %s675 = scalar_lea.vmem %s7, 16
    %676 = vst.msk [vmem:[%s675] sm:$0xff] %vm165, %v673
    %677 = vst.msk [vmem:[%s675 + $0x8] sm:$0xff] %vm165, %v674
    %678 = vrot.lane.b32.xlu0 %v150, 56
    %v679 = vpop.permute.xlu0 %678
    %v682 = vsel %vm165, %v673, 0
    %684 = vmatprep.subr.mxu0 0.0
    %685 = vmatpush1.msra.mxu0 0.0
    %686 = vmatprep.subr.mxu0 0.0
    %687 = vmatpush1.msra.mxu0 0.0
    %688 = vmatprep.subr.mxu0 0.0
    %689 = vmatpush1.msra.mxu0 0.0
    %690 = vmatprep.subr.mxu0 0.0
    %691 = vmatpush1.msra.mxu0 0.0
    %692 = vmatprep.subr.mxu0 0.0
    %693 = vmatpush1.msra.mxu0 0.0
    %694 = vmatprep.subr.mxu0 0.0
    %695 = vmatpush1.msra.mxu0 0.0
    %696 = vmatprep.subr.mxu0 0.0
    %697 = vmatpush1.msra.mxu0 0.0
    %698 = vmatprep.subr.mxu0 0.0
    %699 = vmatpush1.msra.mxu0 0.0
    %700 = vmatprep.subr.mxu0 0.0
    %701 = vmatpush1.msra.mxu0 0.0
    %702 = vmatprep.subr.mxu0 0.0
    %703 = vmatpush1.msra.mxu0 0.0
    %704 = vmatprep.subr.mxu0 0.0
    %705 = vmatpush1.msra.mxu0 0.0
    %706 = vmatprep.subr.mxu0 0.0
    %707 = vmatpush1.msra.mxu0 0.0
    %708 = vmatprep.subr.mxu0 0.0
    %709 = vmatpush1.msra.mxu0 0.0
    %710 = vmatprep.subr.mxu0 0.0
    %711 = vmatpush1.msra.mxu0 0.0
    %712 = vmatprep.subr.mxu0 0.0
    %713 = vmatpush1.msra.mxu0 0.0
    %714 = vmatprep.subr.mxu0 0.0
    %715 = vmatpush1.msra.mxu0 %v679
    %716 = vmatprep.subr.mxu0 0.0
    %717 = vmatpush2.msra.mxu0 0.0
    %718 = vmatprep.subr.mxu0 0.0
    %719 = vmatpush2.msra.mxu0 0.0
    %720 = vmatprep.subr.mxu0 0.0
    %721 = vmatpush2.msra.mxu0 0.0
    %722 = vmatprep.subr.mxu0 0.0
    %723 = vmatpush2.msra.mxu0 0.0
    %724 = vmatprep.subr.mxu0 0.0
    %725 = vmatpush2.msra.mxu0 0.0
    %726 = vmatprep.subr.mxu0 0.0
    %727 = vmatpush2.msra.mxu0 0.0
    %728 = vmatprep.subr.mxu0 0.0
    %729 = vmatpush2.msra.mxu0 0.0
    %730 = vmatprep.subr.mxu0 0.0
    %731 = vmatpush2.msra.mxu0 0.0
    %732 = vmatprep.subr.mxu0 0.0
    %733 = vmatpush2.msra.mxu0 0.0
    %734 = vmatprep.subr.mxu0 0.0
    %735 = vmatpush2.msra.mxu0 0.0
    %736 = vmatprep.subr.mxu0 0.0
    %737 = vmatpush2.msra.mxu0 0.0
    %738 = vmatprep.subr.mxu0 0.0
    %739 = vmatpush2.msra.mxu0 0.0
    %740 = vmatprep.subr.mxu0 0.0
    %741 = vmatpush2.msra.mxu0 0.0
    %742 = vmatprep.subr.mxu0 0.0
    %743 = vmatpush2.msra.mxu0 0.0
    %744 = vmatprep.subr.mxu0 0.0
    %745 = vmatpush2.msra.mxu0 0.0
    %746 = vmatprep.subr.mxu0 0.0
    %747 = vmatpush2.msra.mxu0 0.0
    %748 = vmatprep.mubr.f32.mxu0 0.0
    %749 = vmatmul.mubr.f32.gmra.mxu0 %v682
    %v750 = vpop.f32.mrf.mxu0
    %v751 = vadd.f32 0.0, %v750
    %v752 = vpop.f32.mrf.mxu0
    %753 = vdwg.mxu0
    %754 = vrot.lane.b32.xlu0 %v155, 56
    %v755 = vpop.permute.xlu0 %754
    %v758 = vsel %vm165, %v674, 0
    %760 = vmatprep.subr.mxu0 0.0
    %761 = vmatpush1.msra.mxu0 0.0
    %762 = vmatprep.subr.mxu0 0.0
    %763 = vmatpush1.msra.mxu0 0.0
    %764 = vmatprep.subr.mxu0 0.0
    %765 = vmatpush1.msra.mxu0 0.0
    %766 = vmatprep.subr.mxu0 0.0
    %767 = vmatpush1.msra.mxu0 0.0
    %768 = vmatprep.subr.mxu0 0.0
    %769 = vmatpush1.msra.mxu0 0.0
    %770 = vmatprep.subr.mxu0 0.0
    %771 = vmatpush1.msra.mxu0 0.0
    %772 = vmatprep.subr.mxu0 0.0
    %773 = vmatpush1.msra.mxu0 0.0
    %774 = vmatprep.subr.mxu0 0.0
    %775 = vmatpush1.msra.mxu0 0.0
    %776 = vmatprep.subr.mxu0 0.0
    %777 = vmatpush1.msra.mxu0 0.0
    %778 = vmatprep.subr.mxu0 0.0
    %779 = vmatpush1.msra.mxu0 0.0
    %780 = vmatprep.subr.mxu0 0.0
    %781 = vmatpush1.msra.mxu0 0.0
    %782 = vmatprep.subr.mxu0 0.0
    %783 = vmatpush1.msra.mxu0 0.0
    %784 = vmatprep.subr.mxu0 0.0
    %785 = vmatpush1.msra.mxu0 0.0
    %786 = vmatprep.subr.mxu0 0.0
    %787 = vmatpush1.msra.mxu0 0.0
    %788 = vmatprep.subr.mxu0 0.0
    %789 = vmatpush1.msra.mxu0 0.0
    %790 = vmatprep.subr.mxu0 0.0
    %791 = vmatpush1.msra.mxu0 %v755
    %792 = vmatprep.subr.mxu0 0.0
    %793 = vmatpush2.msra.mxu0 0.0
    %794 = vmatprep.subr.mxu0 0.0
    %795 = vmatpush2.msra.mxu0 0.0
    %796 = vmatprep.subr.mxu0 0.0
    %797 = vmatpush2.msra.mxu0 0.0
    %798 = vmatprep.subr.mxu0 0.0
    %799 = vmatpush2.msra.mxu0 0.0
    %800 = vmatprep.subr.mxu0 0.0
    %801 = vmatpush2.msra.mxu0 0.0
    %802 = vmatprep.subr.mxu0 0.0
    %803 = vmatpush2.msra.mxu0 0.0
    %804 = vmatprep.subr.mxu0 0.0
    %805 = vmatpush2.msra.mxu0 0.0
    %806 = vmatprep.subr.mxu0 0.0
    %807 = vmatpush2.msra.mxu0 0.0
    %808 = vmatprep.subr.mxu0 0.0
    %809 = vmatpush2.msra.mxu0 0.0
    %810 = vmatprep.subr.mxu0 0.0
    %811 = vmatpush2.msra.mxu0 0.0
    %812 = vmatprep.subr.mxu0 0.0
    %813 = vmatpush2.msra.mxu0 0.0
    %814 = vmatprep.subr.mxu0 0.0
    %815 = vmatpush2.msra.mxu0 0.0
    %816 = vmatprep.subr.mxu0 0.0
    %817 = vmatpush2.msra.mxu0 0.0
    %818 = vmatprep.subr.mxu0 0.0
    %819 = vmatpush2.msra.mxu0 0.0
    %820 = vmatprep.subr.mxu0 0.0
    %821 = vmatpush2.msra.mxu0 0.0
    %822 = vmatprep.subr.mxu0 0.0
    %823 = vmatpush2.msra.mxu0 0.0
    %824 = vmatprep.mubr.f32.mxu0 0.0
    %825 = vmatmul.mubr.f32.gmra.mxu0 %v758
    %v826 = vpop.f32.mrf.mxu0
    %v827 = vadd.f32 0.0, %v826
    %v828 = vpop.f32.mrf.mxu0
    %829 = vdwg.mxu0
    %v831 = vsel %vm165, %v751, 0
    %v834 = vsel %vm165, %v827, 0
    %836 = vmatprep.subr.mxu0 0.0
    %837 = vmatpush1.msra.mxu0 0.0
    %838 = vmatprep.subr.mxu0 0.0
    %839 = vmatpush1.msra.mxu0 0.0
    %840 = vmatprep.subr.mxu0 0.0
    %841 = vmatpush1.msra.mxu0 0.0
    %842 = vmatprep.subr.mxu0 0.0
    %843 = vmatpush1.msra.mxu0 0.0
    %844 = vmatprep.subr.mxu0 0.0
    %845 = vmatpush1.msra.mxu0 0.0
    %846 = vmatprep.subr.mxu0 0.0
    %847 = vmatpush1.msra.mxu0 0.0
    %848 = vmatprep.subr.mxu0 0.0
    %849 = vmatpush1.msra.mxu0 0.0
    %850 = vmatprep.subr.mxu0 0.0
    %851 = vmatpush1.msra.mxu0 0.0
    %852 = vmatprep.subr.mxu0 0.0
    %853 = vmatpush1.msra.mxu0 0.0
    %854 = vmatprep.subr.mxu0 0.0
    %855 = vmatpush1.msra.mxu0 0.0
    %856 = vmatprep.subr.mxu0 0.0
    %857 = vmatpush1.msra.mxu0 0.0
    %858 = vmatprep.subr.mxu0 0.0
    %859 = vmatpush1.msra.mxu0 0.0
    %860 = vmatprep.subr.mxu0 0.0
    %861 = vmatpush1.msra.mxu0 0.0
    %862 = vmatprep.subr.mxu0 0.0
    %863 = vmatpush1.msra.mxu0 0.0
    %864 = vmatprep.subr.mxu0 0.0
    %865 = vmatpush1.msra.mxu0 0.0
    %866 = vmatprep.subr.mxu0 0.0
    %867 = vmatpush1.msra.mxu0 %v159
    %868 = vmatprep.subr.mxu0 0.0
    %869 = vmatpush2.msra.mxu0 0.0
    %870 = vmatprep.subr.mxu0 0.0
    %871 = vmatpush2.msra.mxu0 0.0
    %872 = vmatprep.subr.mxu0 0.0
    %873 = vmatpush2.msra.mxu0 0.0
    %874 = vmatprep.subr.mxu0 0.0
    %875 = vmatpush2.msra.mxu0 0.0
    %876 = vmatprep.subr.mxu0 0.0
    %877 = vmatpush2.msra.mxu0 0.0
    %878 = vmatprep.subr.mxu0 0.0
    %879 = vmatpush2.msra.mxu0 0.0
    %880 = vmatprep.subr.mxu0 0.0
    %881 = vmatpush2.msra.mxu0 0.0
    %882 = vmatprep.subr.mxu0 0.0
    %883 = vmatpush2.msra.mxu0 0.0
    %884 = vmatprep.subr.mxu0 0.0
    %885 = vmatpush2.msra.mxu0 0.0
    %886 = vmatprep.subr.mxu0 0.0
    %887 = vmatpush2.msra.mxu0 0.0
    %888 = vmatprep.subr.mxu0 0.0
    %889 = vmatpush2.msra.mxu0 0.0
    %890 = vmatprep.subr.mxu0 0.0
    %891 = vmatpush2.msra.mxu0 0.0
    %892 = vmatprep.subr.mxu0 0.0
    %893 = vmatpush2.msra.mxu0 0.0
    %894 = vmatprep.subr.mxu0 0.0
    %895 = vmatpush2.msra.mxu0 0.0
    %896 = vmatprep.subr.mxu0 0.0
    %897 = vmatpush2.msra.mxu0 0.0
    %898 = vmatprep.subr.mxu0 0.0
    %899 = vmatpush2.msra.mxu0 0.0
    %900 = vmatprep.mubr.f32.mxu0 0.0
    %901 = vmatmul.mubr.f32.gmra.mxu0 %v831
    %v902 = vpop.f32.mrf.mxu0
    %v903 = vadd.f32 0.0, %v902
    %v904 = vpop.f32.mrf.mxu0
    %905 = vmatprep.mubr.f32.mxu0 0.0
    %906 = vmatmul.mubr.f32.gmra.mxu0 %v834
    %v907 = vpop.f32.mrf.mxu0
    %v908 = vadd.f32 0.0, %v907
    %v909 = vpop.f32.mrf.mxu0
    %910 = vdwg.mxu0
    %v912 = vsel %vm165, %v416, 0
    %v915 = vsel %vm165, %v492, 0
    %917 = vmatprep.subr.mxu0 0.0
    %918 = vmatpush1.msra.mxu0 0.0
    %919 = vmatprep.subr.mxu0 0.0
    %920 = vmatpush1.msra.mxu0 0.0
    %921 = vmatprep.subr.mxu0 0.0
    %922 = vmatpush1.msra.mxu0 0.0
    %923 = vmatprep.subr.mxu0 0.0
    %924 = vmatpush1.msra.mxu0 0.0
    %925 = vmatprep.subr.mxu0 0.0
    %926 = vmatpush1.msra.mxu0 0.0
    %927 = vmatprep.subr.mxu0 0.0
    %928 = vmatpush1.msra.mxu0 0.0
    %929 = vmatprep.subr.mxu0 0.0
    %930 = vmatpush1.msra.mxu0 0.0
    %931 = vmatprep.subr.mxu0 0.0
    %932 = vmatpush1.msra.mxu0 0.0
    %933 = vmatprep.subr.mxu0 0.0
    %934 = vmatpush1.msra.mxu0 0.0
    %935 = vmatprep.subr.mxu0 0.0
    %936 = vmatpush1.msra.mxu0 0.0
    %937 = vmatprep.subr.mxu0 0.0
    %938 = vmatpush1.msra.mxu0 0.0
    %939 = vmatprep.subr.mxu0 0.0
    %940 = vmatpush1.msra.mxu0 0.0
    %941 = vmatprep.subr.mxu0 0.0
    %942 = vmatpush1.msra.mxu0 0.0
    %943 = vmatprep.subr.mxu0 0.0
    %944 = vmatpush1.msra.mxu0 0.0
    %945 = vmatprep.subr.mxu0 0.0
    %946 = vmatpush1.msra.mxu0 0.0
    %947 = vmatprep.subr.mxu0 0.0
    %948 = vmatpush1.msra.mxu0 %v158
    %949 = vmatprep.subr.mxu0 0.0
    %950 = vmatpush2.msra.mxu0 0.0
    %951 = vmatprep.subr.mxu0 0.0
    %952 = vmatpush2.msra.mxu0 0.0
    %953 = vmatprep.subr.mxu0 0.0
    %954 = vmatpush2.msra.mxu0 0.0
    %955 = vmatprep.subr.mxu0 0.0
    %956 = vmatpush2.msra.mxu0 0.0
    %957 = vmatprep.subr.mxu0 0.0
    %958 = vmatpush2.msra.mxu0 0.0
    %959 = vmatprep.subr.mxu0 0.0
    %960 = vmatpush2.msra.mxu0 0.0
    %961 = vmatprep.subr.mxu0 0.0
    %962 = vmatpush2.msra.mxu0 0.0
    %963 = vmatprep.subr.mxu0 0.0
    %964 = vmatpush2.msra.mxu0 0.0
    %965 = vmatprep.subr.mxu0 0.0
    %966 = vmatpush2.msra.mxu0 0.0
    %967 = vmatprep.subr.mxu0 0.0
    %968 = vmatpush2.msra.mxu0 0.0
    %969 = vmatprep.subr.mxu0 0.0
    %970 = vmatpush2.msra.mxu0 0.0
    %971 = vmatprep.subr.mxu0 0.0
    %972 = vmatpush2.msra.mxu0 0.0
    %973 = vmatprep.subr.mxu0 0.0
    %974 = vmatpush2.msra.mxu0 0.0
    %975 = vmatprep.subr.mxu0 0.0
    %976 = vmatpush2.msra.mxu0 0.0
    %977 = vmatprep.subr.mxu0 0.0
    %978 = vmatpush2.msra.mxu0 0.0
    %979 = vmatprep.subr.mxu0 0.0
    %980 = vmatpush2.msra.mxu0 0.0
    %981 = vmatprep.mubr.f32.mxu0 0.0
    %982 = vmatmul.mubr.f32.gmra.mxu0 %v912
    %v983 = vpop.f32.mrf.mxu0
    %v984 = vadd.f32 %v903, %v983
    %v985 = vpop.f32.mrf.mxu0
    %986 = vmatprep.mubr.f32.mxu0 0.0
    %987 = vmatmul.mubr.f32.gmra.mxu0 %v915
    %v988 = vpop.f32.mrf.mxu0
    %v989 = vadd.f32 %v908, %v988
    %v990 = vpop.f32.mrf.mxu0
    %991 = vdwg.mxu0
    %992 = vrot.lane.b32.xlu0 %v150, 112
    %v993 = vpop.permute.xlu0 %992
    %994 = vrot.lane.b32.xlu0 %v150, 80
    %v995 = vpop.permute.xlu0 %994
    %v996 = vsel %vm165, %v993, 0
    %v998 = vsel %vm165, %v995, 0
    %1000 = vmatprep.subr.mxu0 0.0
    %1001 = vmatpush1.xpose.msra.mxu0 0.0
    %1002 = vmatprep.subr.mxu0 0.0
    %1003 = vmatpush1.xpose.msra.mxu0 0.0
    %1004 = vmatprep.subr.mxu0 0.0
    %1005 = vmatpush1.xpose.msra.mxu0 0.0
    %1006 = vmatprep.subr.mxu0 0.0
    %1007 = vmatpush1.xpose.msra.mxu0 0.0
    %1008 = vmatprep.subr.mxu0 0.0
    %1009 = vmatpush1.xpose.msra.mxu0 0.0
    %1010 = vmatprep.subr.mxu0 0.0
    %1011 = vmatpush1.xpose.msra.mxu0 0.0
    %1012 = vmatprep.subr.mxu0 0.0
    %1013 = vmatpush1.xpose.msra.mxu0 0.0
    %1014 = vmatprep.subr.mxu0 0.0
    %1015 = vmatpush1.xpose.msra.mxu0 0.0
    %1016 = vmatprep.subr.mxu0 0.0
    %1017 = vmatpush1.xpose.msra.mxu0 0.0
    %1018 = vmatprep.subr.mxu0 0.0
    %1019 = vmatpush1.xpose.msra.mxu0 0.0
    %1020 = vmatprep.subr.mxu0 0.0
    %1021 = vmatpush1.xpose.msra.mxu0 0.0
    %1022 = vmatprep.subr.mxu0 0.0
    %1023 = vmatpush1.xpose.msra.mxu0 0.0
    %1024 = vmatprep.subr.mxu0 0.0
    %1025 = vmatpush1.xpose.msra.mxu0 0.0
    %1026 = vmatprep.subr.mxu0 0.0
    %1027 = vmatpush1.xpose.msra.mxu0 0.0
    %1028 = vmatprep.subr.mxu0 0.0
    %1029 = vmatpush1.xpose.msra.mxu0 0.0
    %1030 = vmatprep.subr.mxu0 0.0
    %1031 = vmatpush1.xpose.msra.mxu0 %v998
    %1032 = vmatprep.subr.mxu0 0.0
    %1033 = vmatpush2.xpose.msra.mxu0 0.0
    %1034 = vmatprep.subr.mxu0 0.0
    %1035 = vmatpush2.xpose.msra.mxu0 0.0
    %1036 = vmatprep.subr.mxu0 0.0
    %1037 = vmatpush2.xpose.msra.mxu0 0.0
    %1038 = vmatprep.subr.mxu0 0.0
    %1039 = vmatpush2.xpose.msra.mxu0 0.0
    %1040 = vmatprep.subr.mxu0 0.0
    %1041 = vmatpush2.xpose.msra.mxu0 0.0
    %1042 = vmatprep.subr.mxu0 0.0
    %1043 = vmatpush2.xpose.msra.mxu0 0.0
    %1044 = vmatprep.subr.mxu0 0.0
    %1045 = vmatpush2.xpose.msra.mxu0 0.0
    %1046 = vmatprep.subr.mxu0 0.0
    %1047 = vmatpush2.xpose.msra.mxu0 0.0
    %1048 = vmatprep.subr.mxu0 0.0
    %1049 = vmatpush2.xpose.msra.mxu0 0.0
    %1050 = vmatprep.subr.mxu0 0.0
    %1051 = vmatpush2.xpose.msra.mxu0 0.0
    %1052 = vmatprep.subr.mxu0 0.0
    %1053 = vmatpush2.xpose.msra.mxu0 0.0
    %1054 = vmatprep.subr.mxu0 0.0
    %1055 = vmatpush2.xpose.msra.mxu0 0.0
    %1056 = vmatprep.subr.mxu0 0.0
    %1057 = vmatpush2.xpose.msra.mxu0 0.0
    %1058 = vmatprep.subr.mxu0 0.0
    %1059 = vmatpush2.xpose.msra.mxu0 0.0
    %1060 = vmatprep.subr.mxu0 0.0
    %1061 = vmatpush2.xpose.msra.mxu0 0.0
    %1062 = vmatprep.subr.mxu0 0.0
    %1063 = vmatpush2.xpose.msra.mxu0 0.0
    %1064 = vmatprep.mubr.f32.mxu0 0.0
    %1065 = vmatmul.mubr.f32.gmra.mxu0 %v996
    %v1066 = vpop.f32.mrf.mxu0
    %v1067 = vadd.f32 0.0, %v1066
    %v1068 = vpop.f32.mrf.mxu0
    %1069 = vdwg.mxu0
    %1070 = vrot.lane.b32.xlu0 %v155, 112
    %v1071 = vpop.permute.xlu0 %1070
    %1072 = vrot.lane.b32.xlu0 %v155, 80
    %v1073 = vpop.permute.xlu0 %1072
    %v1074 = vsel %vm165, %v1071, 0
    %v1076 = vsel %vm165, %v1073, 0
    %1078 = vmatprep.subr.mxu0 0.0
    %1079 = vmatpush1.xpose.msra.mxu0 0.0
    %1080 = vmatprep.subr.mxu0 0.0
    %1081 = vmatpush1.xpose.msra.mxu0 0.0
    %1082 = vmatprep.subr.mxu0 0.0
    %1083 = vmatpush1.xpose.msra.mxu0 0.0
    %1084 = vmatprep.subr.mxu0 0.0
    %1085 = vmatpush1.xpose.msra.mxu0 0.0
    %1086 = vmatprep.subr.mxu0 0.0
    %1087 = vmatpush1.xpose.msra.mxu0 0.0
    %1088 = vmatprep.subr.mxu0 0.0
    %1089 = vmatpush1.xpose.msra.mxu0 0.0
    %1090 = vmatprep.subr.mxu0 0.0
    %1091 = vmatpush1.xpose.msra.mxu0 0.0
    %1092 = vmatprep.subr.mxu0 0.0
    %1093 = vmatpush1.xpose.msra.mxu0 0.0
    %1094 = vmatprep.subr.mxu0 0.0
    %1095 = vmatpush1.xpose.msra.mxu0 0.0
    %1096 = vmatprep.subr.mxu0 0.0
    %1097 = vmatpush1.xpose.msra.mxu0 0.0
    %1098 = vmatprep.subr.mxu0 0.0
    %1099 = vmatpush1.xpose.msra.mxu0 0.0
    %1100 = vmatprep.subr.mxu0 0.0
    %1101 = vmatpush1.xpose.msra.mxu0 0.0
    %1102 = vmatprep.subr.mxu0 0.0
    %1103 = vmatpush1.xpose.msra.mxu0 0.0
    %1104 = vmatprep.subr.mxu0 0.0
    %1105 = vmatpush1.xpose.msra.mxu0 0.0
    %1106 = vmatprep.subr.mxu0 0.0
    %1107 = vmatpush1.xpose.msra.mxu0 0.0
    %1108 = vmatprep.subr.mxu0 0.0
    %1109 = vmatpush1.xpose.msra.mxu0 %v1076
    %1110 = vmatprep.subr.mxu0 0.0
    %1111 = vmatpush2.xpose.msra.mxu0 0.0
    %1112 = vmatprep.subr.mxu0 0.0
    %1113 = vmatpush2.xpose.msra.mxu0 0.0
    %1114 = vmatprep.subr.mxu0 0.0
    %1115 = vmatpush2.xpose.msra.mxu0 0.0
    %1116 = vmatprep.subr.mxu0 0.0
    %1117 = vmatpush2.xpose.msra.mxu0 0.0
    %1118 = vmatprep.subr.mxu0 0.0
    %1119 = vmatpush2.xpose.msra.mxu0 0.0
    %1120 = vmatprep.subr.mxu0 0.0
    %1121 = vmatpush2.xpose.msra.mxu0 0.0
    %1122 = vmatprep.subr.mxu0 0.0
    %1123 = vmatpush2.xpose.msra.mxu0 0.0
    %1124 = vmatprep.subr.mxu0 0.0
    %1125 = vmatpush2.xpose.msra.mxu0 0.0
    %1126 = vmatprep.subr.mxu0 0.0
    %1127 = vmatpush2.xpose.msra.mxu0 0.0
    %1128 = vmatprep.subr.mxu0 0.0
    %1129 = vmatpush2.xpose.msra.mxu0 0.0
    %1130 = vmatprep.subr.mxu0 0.0
    %1131 = vmatpush2.xpose.msra.mxu0 0.0
    %1132 = vmatprep.subr.mxu0 0.0
    %1133 = vmatpush2.xpose.msra.mxu0 0.0
    %1134 = vmatprep.subr.mxu0 0.0
    %1135 = vmatpush2.xpose.msra.mxu0 0.0
    %1136 = vmatprep.subr.mxu0 0.0
    %1137 = vmatpush2.xpose.msra.mxu0 0.0
    %1138 = vmatprep.subr.mxu0 0.0
    %1139 = vmatpush2.xpose.msra.mxu0 0.0
    %1140 = vmatprep.subr.mxu0 0.0
    %1141 = vmatpush2.xpose.msra.mxu0 0.0
    %1142 = vmatprep.mubr.f32.mxu0 0.0
    %1143 = vmatmul.mubr.f32.gmra.mxu0 %v1074
    %v1144 = vpop.f32.mrf.mxu0
    %v1145 = vadd.f32 0.0, %v1144
    %v1146 = vpop.f32.mrf.mxu0
    %1147 = vdwg.mxu0
    %v1148 = vmul.f32 %v1067, 0.35355338
    %v1149 = vmul.f32 %v1145, 0.35355338
    %v1150 = vsel %vm165, %v1148, -inf
    %1151 = vmax.xlane.f32.xlu0 %v1150
    %v1152 = vpop.xlane.xlu0 %1151
    %v1153 = vsel %vm165, %v1149, -inf
    %1154 = vmax.xlane.f32.xlu0 %v1153
    %v1155 = vpop.xlane.xlu0 %1154
    %v1156 = vsub.f32 %v1148, %v1152
    %v1157 = vsub.f32 %v1149, %v1155
    %v1158 = vmul.f32 %v1156, 1.442695
    %v1159 = vpow.pop %v1158
    %v1160 = vmul.f32 %v1157, 1.442695
    %v1161 = vpow.pop %v1160
    %v1162 = vsel %vm165, %v1159, 0.0
    %1163 = vadd.xlane.f32.xlu0 %v1162
    %v1164 = vpop.xlane.xlu0 %1163
    %v1165 = vsel %vm165, %v1161, 0.0
    %1166 = vadd.xlane.f32.xlu0 %v1165
    %v1167 = vpop.xlane.xlu0 %1166
    %v1168 = vrcp.pop %v1164
    %v1169 = vrcp.pop %v1167
    %v1170 = vmul.f32 %v1159, %v1168
    %v1171 = vmul.f32 %v1161, %v1169
    %s1172 = scalar_lea.vmem %s7, 32
    %1173 = vst.msk [vmem:[%s1172] sm:$0xff] %vm165, %v1170
    %1174 = vst.msk [vmem:[%s1172 + $0x8] sm:$0xff] %vm165, %v1171
    %1175 = vrot.lane.b32.xlu0 %v150, 48
    %v1176 = vpop.permute.xlu0 %1175
    %v1179 = vsel %vm165, %v1170, 0
    %1181 = vmatprep.subr.mxu0 0.0
    %1182 = vmatpush1.msra.mxu0 0.0
    %1183 = vmatprep.subr.mxu0 0.0
    %1184 = vmatpush1.msra.mxu0 0.0
    %1185 = vmatprep.subr.mxu0 0.0
    %1186 = vmatpush1.msra.mxu0 0.0
    %1187 = vmatprep.subr.mxu0 0.0
    %1188 = vmatpush1.msra.mxu0 0.0
    %1189 = vmatprep.subr.mxu0 0.0
    %1190 = vmatpush1.msra.mxu0 0.0
    %1191 = vmatprep.subr.mxu0 0.0
    %1192 = vmatpush1.msra.mxu0 0.0
    %1193 = vmatprep.subr.mxu0 0.0
    %1194 = vmatpush1.msra.mxu0 0.0
    %1195 = vmatprep.subr.mxu0 0.0
    %1196 = vmatpush1.msra.mxu0 0.0
    %1197 = vmatprep.subr.mxu0 0.0
    %1198 = vmatpush1.msra.mxu0 0.0
    %1199 = vmatprep.subr.mxu0 0.0
    %1200 = vmatpush1.msra.mxu0 0.0
    %1201 = vmatprep.subr.mxu0 0.0
    %1202 = vmatpush1.msra.mxu0 0.0
    %1203 = vmatprep.subr.mxu0 0.0
    %1204 = vmatpush1.msra.mxu0 0.0
    %1205 = vmatprep.subr.mxu0 0.0
    %1206 = vmatpush1.msra.mxu0 0.0
    %1207 = vmatprep.subr.mxu0 0.0
    %1208 = vmatpush1.msra.mxu0 0.0
    %1209 = vmatprep.subr.mxu0 0.0
    %1210 = vmatpush1.msra.mxu0 0.0
    %1211 = vmatprep.subr.mxu0 0.0
    %1212 = vmatpush1.msra.mxu0 %v1176
    %1213 = vmatprep.subr.mxu0 0.0
    %1214 = vmatpush2.msra.mxu0 0.0
    %1215 = vmatprep.subr.mxu0 0.0
    %1216 = vmatpush2.msra.mxu0 0.0
    %1217 = vmatprep.subr.mxu0 0.0
    %1218 = vmatpush2.msra.mxu0 0.0
    %1219 = vmatprep.subr.mxu0 0.0
    %1220 = vmatpush2.msra.mxu0 0.0
    %1221 = vmatprep.subr.mxu0 0.0
    %1222 = vmatpush2.msra.mxu0 0.0
    %1223 = vmatprep.subr.mxu0 0.0
    %1224 = vmatpush2.msra.mxu0 0.0
    %1225 = vmatprep.subr.mxu0 0.0
    %1226 = vmatpush2.msra.mxu0 0.0
    %1227 = vmatprep.subr.mxu0 0.0
    %1228 = vmatpush2.msra.mxu0 0.0
    %1229 = vmatprep.subr.mxu0 0.0
    %1230 = vmatpush2.msra.mxu0 0.0
    %1231 = vmatprep.subr.mxu0 0.0
    %1232 = vmatpush2.msra.mxu0 0.0
    %1233 = vmatprep.subr.mxu0 0.0
    %1234 = vmatpush2.msra.mxu0 0.0
    %1235 = vmatprep.subr.mxu0 0.0
    %1236 = vmatpush2.msra.mxu0 0.0
    %1237 = vmatprep.subr.mxu0 0.0
    %1238 = vmatpush2.msra.mxu0 0.0
    %1239 = vmatprep.subr.mxu0 0.0
    %1240 = vmatpush2.msra.mxu0 0.0
    %1241 = vmatprep.subr.mxu0 0.0
    %1242 = vmatpush2.msra.mxu0 0.0
    %1243 = vmatprep.subr.mxu0 0.0
    %1244 = vmatpush2.msra.mxu0 0.0
    %1245 = vmatprep.mubr.f32.mxu0 0.0
    %1246 = vmatmul.mubr.f32.gmra.mxu0 %v1179
    %v1247 = vpop.f32.mrf.mxu0
    %v1248 = vadd.f32 0.0, %v1247
    %v1249 = vpop.f32.mrf.mxu0
    %1250 = vdwg.mxu0
    %1251 = vrot.lane.b32.xlu0 %v155, 48
    %v1252 = vpop.permute.xlu0 %1251
    %v1255 = vsel %vm165, %v1171, 0
    %1257 = vmatprep.subr.mxu0 0.0
    %1258 = vmatpush1.msra.mxu0 0.0
    %1259 = vmatprep.subr.mxu0 0.0
    %1260 = vmatpush1.msra.mxu0 0.0
    %1261 = vmatprep.subr.mxu0 0.0
    %1262 = vmatpush1.msra.mxu0 0.0
    %1263 = vmatprep.subr.mxu0 0.0
    %1264 = vmatpush1.msra.mxu0 0.0
    %1265 = vmatprep.subr.mxu0 0.0
    %1266 = vmatpush1.msra.mxu0 0.0
    %1267 = vmatprep.subr.mxu0 0.0
    %1268 = vmatpush1.msra.mxu0 0.0
    %1269 = vmatprep.subr.mxu0 0.0
    %1270 = vmatpush1.msra.mxu0 0.0
    %1271 = vmatprep.subr.mxu0 0.0
    %1272 = vmatpush1.msra.mxu0 0.0
    %1273 = vmatprep.subr.mxu0 0.0
    %1274 = vmatpush1.msra.mxu0 0.0
    %1275 = vmatprep.subr.mxu0 0.0
    %1276 = vmatpush1.msra.mxu0 0.0
    %1277 = vmatprep.subr.mxu0 0.0
    %1278 = vmatpush1.msra.mxu0 0.0
    %1279 = vmatprep.subr.mxu0 0.0
    %1280 = vmatpush1.msra.mxu0 0.0
    %1281 = vmatprep.subr.mxu0 0.0
    %1282 = vmatpush1.msra.mxu0 0.0
    %1283 = vmatprep.subr.mxu0 0.0
    %1284 = vmatpush1.msra.mxu0 0.0
    %1285 = vmatprep.subr.mxu0 0.0
    %1286 = vmatpush1.msra.mxu0 0.0
    %1287 = vmatprep.subr.mxu0 0.0
    %1288 = vmatpush1.msra.mxu0 %v1252
    %1289 = vmatprep.subr.mxu0 0.0
    %1290 = vmatpush2.msra.mxu0 0.0
    %1291 = vmatprep.subr.mxu0 0.0
    %1292 = vmatpush2.msra.mxu0 0.0
    %1293 = vmatprep.subr.mxu0 0.0
    %1294 = vmatpush2.msra.mxu0 0.0
    %1295 = vmatprep.subr.mxu0 0.0
    %1296 = vmatpush2.msra.mxu0 0.0
    %1297 = vmatprep.subr.mxu0 0.0
    %1298 = vmatpush2.msra.mxu0 0.0
    %1299 = vmatprep.subr.mxu0 0.0
    %1300 = vmatpush2.msra.mxu0 0.0
    %1301 = vmatprep.subr.mxu0 0.0
    %1302 = vmatpush2.msra.mxu0 0.0
    %1303 = vmatprep.subr.mxu0 0.0
    %1304 = vmatpush2.msra.mxu0 0.0
    %1305 = vmatprep.subr.mxu0 0.0
    %1306 = vmatpush2.msra.mxu0 0.0
    %1307 = vmatprep.subr.mxu0 0.0
    %1308 = vmatpush2.msra.mxu0 0.0
    %1309 = vmatprep.subr.mxu0 0.0
    %1310 = vmatpush2.msra.mxu0 0.0
    %1311 = vmatprep.subr.mxu0 0.0
    %1312 = vmatpush2.msra.mxu0 0.0
    %1313 = vmatprep.subr.mxu0 0.0
    %1314 = vmatpush2.msra.mxu0 0.0
    %1315 = vmatprep.subr.mxu0 0.0
    %1316 = vmatpush2.msra.mxu0 0.0
    %1317 = vmatprep.subr.mxu0 0.0
    %1318 = vmatpush2.msra.mxu0 0.0
    %1319 = vmatprep.subr.mxu0 0.0
    %1320 = vmatpush2.msra.mxu0 0.0
    %1321 = vmatprep.mubr.f32.mxu0 0.0
    %1322 = vmatmul.mubr.f32.gmra.mxu0 %v1255
    %v1323 = vpop.f32.mrf.mxu0
    %v1324 = vadd.f32 0.0, %v1323
    %v1325 = vpop.f32.mrf.mxu0
    %1326 = vdwg.mxu0
    %v1328 = vsel %vm165, %v1248, 0
    %v1331 = vsel %vm165, %v1324, 0
    %1333 = vmatprep.subr.mxu0 0.0
    %1334 = vmatpush1.msra.mxu0 0.0
    %1335 = vmatprep.subr.mxu0 0.0
    %1336 = vmatpush1.msra.mxu0 0.0
    %1337 = vmatprep.subr.mxu0 0.0
    %1338 = vmatpush1.msra.mxu0 0.0
    %1339 = vmatprep.subr.mxu0 0.0
    %1340 = vmatpush1.msra.mxu0 0.0
    %1341 = vmatprep.subr.mxu0 0.0
    %1342 = vmatpush1.msra.mxu0 0.0
    %1343 = vmatprep.subr.mxu0 0.0
    %1344 = vmatpush1.msra.mxu0 0.0
    %1345 = vmatprep.subr.mxu0 0.0
    %1346 = vmatpush1.msra.mxu0 0.0
    %1347 = vmatprep.subr.mxu0 0.0
    %1348 = vmatpush1.msra.mxu0 0.0
    %1349 = vmatprep.subr.mxu0 0.0
    %1350 = vmatpush1.msra.mxu0 0.0
    %1351 = vmatprep.subr.mxu0 0.0
    %1352 = vmatpush1.msra.mxu0 0.0
    %1353 = vmatprep.subr.mxu0 0.0
    %1354 = vmatpush1.msra.mxu0 0.0
    %1355 = vmatprep.subr.mxu0 0.0
    %1356 = vmatpush1.msra.mxu0 0.0
    %1357 = vmatprep.subr.mxu0 0.0
    %1358 = vmatpush1.msra.mxu0 0.0
    %1359 = vmatprep.subr.mxu0 0.0
    %1360 = vmatpush1.msra.mxu0 0.0
    %1361 = vmatprep.subr.mxu0 0.0
    %1362 = vmatpush1.msra.mxu0 0.0
    %1363 = vmatprep.subr.mxu0 0.0
    %1364 = vmatpush1.msra.mxu0 %v160
    %1365 = vmatprep.subr.mxu0 0.0
    %1366 = vmatpush2.msra.mxu0 0.0
    %1367 = vmatprep.subr.mxu0 0.0
    %1368 = vmatpush2.msra.mxu0 0.0
    %1369 = vmatprep.subr.mxu0 0.0
    %1370 = vmatpush2.msra.mxu0 0.0
    %1371 = vmatprep.subr.mxu0 0.0
    %1372 = vmatpush2.msra.mxu0 0.0
    %1373 = vmatprep.subr.mxu0 0.0
    %1374 = vmatpush2.msra.mxu0 0.0
    %1375 = vmatprep.subr.mxu0 0.0
    %1376 = vmatpush2.msra.mxu0 0.0
    %1377 = vmatprep.subr.mxu0 0.0
    %1378 = vmatpush2.msra.mxu0 0.0
    %1379 = vmatprep.subr.mxu0 0.0
    %1380 = vmatpush2.msra.mxu0 0.0
    %1381 = vmatprep.subr.mxu0 0.0
    %1382 = vmatpush2.msra.mxu0 0.0
    %1383 = vmatprep.subr.mxu0 0.0
    %1384 = vmatpush2.msra.mxu0 0.0
    %1385 = vmatprep.subr.mxu0 0.0
    %1386 = vmatpush2.msra.mxu0 0.0
    %1387 = vmatprep.subr.mxu0 0.0
    %1388 = vmatpush2.msra.mxu0 0.0
    %1389 = vmatprep.subr.mxu0 0.0
    %1390 = vmatpush2.msra.mxu0 0.0
    %1391 = vmatprep.subr.mxu0 0.0
    %1392 = vmatpush2.msra.mxu0 0.0
    %1393 = vmatprep.subr.mxu0 0.0
    %1394 = vmatpush2.msra.mxu0 0.0
    %1395 = vmatprep.subr.mxu0 0.0
    %1396 = vmatpush2.msra.mxu0 0.0
    %1397 = vmatprep.mubr.f32.mxu0 0.0
    %1398 = vmatmul.mubr.f32.gmra.mxu0 %v1328
    %v1399 = vpop.f32.mrf.mxu0
    %v1400 = vadd.f32 0.0, %v1399
    %v1401 = vpop.f32.mrf.mxu0
    %1402 = vmatprep.mubr.f32.mxu0 0.0
    %1403 = vmatmul.mubr.f32.gmra.mxu0 %v1331
    %v1404 = vpop.f32.mrf.mxu0
    %v1405 = vadd.f32 0.0, %v1404
    %v1406 = vpop.f32.mrf.mxu0
    %1407 = vdwg.mxu0
    %v1408 = vadd.f32 %v984, %v1400
    %v1409 = vadd.f32 %v989, %v1405
    %1410 = vrot.lane.b32.xlu0 %v150, 104
    %v1411 = vpop.permute.xlu0 %1410
    %1412 = vrot.lane.b32.xlu0 %v150, 72
    %v1413 = vpop.permute.xlu0 %1412
    %v1414 = vsel %vm165, %v1411, 0
    %v1416 = vsel %vm165, %v1413, 0
    %1418 = vmatprep.subr.mxu0 0.0
    %1419 = vmatpush1.xpose.msra.mxu0 0.0
    %1420 = vmatprep.subr.mxu0 0.0
    %1421 = vmatpush1.xpose.msra.mxu0 0.0
    %1422 = vmatprep.subr.mxu0 0.0
    %1423 = vmatpush1.xpose.msra.mxu0 0.0
    %1424 = vmatprep.subr.mxu0 0.0
    %1425 = vmatpush1.xpose.msra.mxu0 0.0
    %1426 = vmatprep.subr.mxu0 0.0
    %1427 = vmatpush1.xpose.msra.mxu0 0.0
    %1428 = vmatprep.subr.mxu0 0.0
    %1429 = vmatpush1.xpose.msra.mxu0 0.0
    %1430 = vmatprep.subr.mxu0 0.0
    %1431 = vmatpush1.xpose.msra.mxu0 0.0
    %1432 = vmatprep.subr.mxu0 0.0
    %1433 = vmatpush1.xpose.msra.mxu0 0.0
    %1434 = vmatprep.subr.mxu0 0.0
    %1435 = vmatpush1.xpose.msra.mxu0 0.0
    %1436 = vmatprep.subr.mxu0 0.0
    %1437 = vmatpush1.xpose.msra.mxu0 0.0
    %1438 = vmatprep.subr.mxu0 0.0
    %1439 = vmatpush1.xpose.msra.mxu0 0.0
    %1440 = vmatprep.subr.mxu0 0.0
    %1441 = vmatpush1.xpose.msra.mxu0 0.0
    %1442 = vmatprep.subr.mxu0 0.0
    %1443 = vmatpush1.xpose.msra.mxu0 0.0
    %1444 = vmatprep.subr.mxu0 0.0
    %1445 = vmatpush1.xpose.msra.mxu0 0.0
    %1446 = vmatprep.subr.mxu0 0.0
    %1447 = vmatpush1.xpose.msra.mxu0 0.0
    %1448 = vmatprep.subr.mxu0 0.0
    %1449 = vmatpush1.xpose.msra.mxu0 %v1416
    %1450 = vmatprep.subr.mxu0 0.0
    %1451 = vmatpush2.xpose.msra.mxu0 0.0
    %1452 = vmatprep.subr.mxu0 0.0
    %1453 = vmatpush2.xpose.msra.mxu0 0.0
    %1454 = vmatprep.subr.mxu0 0.0
    %1455 = vmatpush2.xpose.msra.mxu0 0.0
    %1456 = vmatprep.subr.mxu0 0.0
    %1457 = vmatpush2.xpose.msra.mxu0 0.0
    %1458 = vmatprep.subr.mxu0 0.0
    %1459 = vmatpush2.xpose.msra.mxu0 0.0
    %1460 = vmatprep.subr.mxu0 0.0
    %1461 = vmatpush2.xpose.msra.mxu0 0.0
    %1462 = vmatprep.subr.mxu0 0.0
    %1463 = vmatpush2.xpose.msra.mxu0 0.0
    %1464 = vmatprep.subr.mxu0 0.0
    %1465 = vmatpush2.xpose.msra.mxu0 0.0
    %1466 = vmatprep.subr.mxu0 0.0
    %1467 = vmatpush2.xpose.msra.mxu0 0.0
    %1468 = vmatprep.subr.mxu0 0.0
    %1469 = vmatpush2.xpose.msra.mxu0 0.0
    %1470 = vmatprep.subr.mxu0 0.0
    %1471 = vmatpush2.xpose.msra.mxu0 0.0
    %1472 = vmatprep.subr.mxu0 0.0
    %1473 = vmatpush2.xpose.msra.mxu0 0.0
    %1474 = vmatprep.subr.mxu0 0.0
    %1475 = vmatpush2.xpose.msra.mxu0 0.0
    %1476 = vmatprep.subr.mxu0 0.0
    %1477 = vmatpush2.xpose.msra.mxu0 0.0
    %1478 = vmatprep.subr.mxu0 0.0
    %1479 = vmatpush2.xpose.msra.mxu0 0.0
    %1480 = vmatprep.subr.mxu0 0.0
    %1481 = vmatpush2.xpose.msra.mxu0 0.0
    %1482 = vmatprep.mubr.f32.mxu0 0.0
    %1483 = vmatmul.mubr.f32.gmra.mxu0 %v1414
    %v1484 = vpop.f32.mrf.mxu0
    %v1485 = vadd.f32 0.0, %v1484
    %v1486 = vpop.f32.mrf.mxu0
    %1487 = vdwg.mxu0
    %1488 = vrot.lane.b32.xlu0 %v155, 104
    %v1489 = vpop.permute.xlu0 %1488
    %1490 = vrot.lane.b32.xlu0 %v155, 72
    %v1491 = vpop.permute.xlu0 %1490
    %v1492 = vsel %vm165, %v1489, 0
    %v1494 = vsel %vm165, %v1491, 0
    %1496 = vmatprep.subr.mxu0 0.0
    %1497 = vmatpush1.xpose.msra.mxu0 0.0
    %1498 = vmatprep.subr.mxu0 0.0
    %1499 = vmatpush1.xpose.msra.mxu0 0.0
    %1500 = vmatprep.subr.mxu0 0.0
    %1501 = vmatpush1.xpose.msra.mxu0 0.0
    %1502 = vmatprep.subr.mxu0 0.0
    %1503 = vmatpush1.xpose.msra.mxu0 0.0
    %1504 = vmatprep.subr.mxu0 0.0
    %1505 = vmatpush1.xpose.msra.mxu0 0.0
    %1506 = vmatprep.subr.mxu0 0.0
    %1507 = vmatpush1.xpose.msra.mxu0 0.0
    %1508 = vmatprep.subr.mxu0 0.0
    %1509 = vmatpush1.xpose.msra.mxu0 0.0
    %1510 = vmatprep.subr.mxu0 0.0
    %1511 = vmatpush1.xpose.msra.mxu0 0.0
    %1512 = vmatprep.subr.mxu0 0.0
    %1513 = vmatpush1.xpose.msra.mxu0 0.0
    %1514 = vmatprep.subr.mxu0 0.0
    %1515 = vmatpush1.xpose.msra.mxu0 0.0
    %1516 = vmatprep.subr.mxu0 0.0
    %1517 = vmatpush1.xpose.msra.mxu0 0.0
    %1518 = vmatprep.subr.mxu0 0.0
    %1519 = vmatpush1.xpose.msra.mxu0 0.0
    %1520 = vmatprep.subr.mxu0 0.0
    %1521 = vmatpush1.xpose.msra.mxu0 0.0
    %1522 = vmatprep.subr.mxu0 0.0
    %1523 = vmatpush1.xpose.msra.mxu0 0.0
    %1524 = vmatprep.subr.mxu0 0.0
    %1525 = vmatpush1.xpose.msra.mxu0 0.0
    %1526 = vmatprep.subr.mxu0 0.0
    %1527 = vmatpush1.xpose.msra.mxu0 %v1494
    %1528 = vmatprep.subr.mxu0 0.0
    %1529 = vmatpush2.xpose.msra.mxu0 0.0
    %1530 = vmatprep.subr.mxu0 0.0
    %1531 = vmatpush2.xpose.msra.mxu0 0.0
    %1532 = vmatprep.subr.mxu0 0.0
    %1533 = vmatpush2.xpose.msra.mxu0 0.0
    %1534 = vmatprep.subr.mxu0 0.0
    %1535 = vmatpush2.xpose.msra.mxu0 0.0
    %1536 = vmatprep.subr.mxu0 0.0
    %1537 = vmatpush2.xpose.msra.mxu0 0.0
    %1538 = vmatprep.subr.mxu0 0.0
    %1539 = vmatpush2.xpose.msra.mxu0 0.0
    %1540 = vmatprep.subr.mxu0 0.0
    %1541 = vmatpush2.xpose.msra.mxu0 0.0
    %1542 = vmatprep.subr.mxu0 0.0
    %1543 = vmatpush2.xpose.msra.mxu0 0.0
    %1544 = vmatprep.subr.mxu0 0.0
    %1545 = vmatpush2.xpose.msra.mxu0 0.0
    %1546 = vmatprep.subr.mxu0 0.0
    %1547 = vmatpush2.xpose.msra.mxu0 0.0
    %1548 = vmatprep.subr.mxu0 0.0
    %1549 = vmatpush2.xpose.msra.mxu0 0.0
    %1550 = vmatprep.subr.mxu0 0.0
    %1551 = vmatpush2.xpose.msra.mxu0 0.0
    %1552 = vmatprep.subr.mxu0 0.0
    %1553 = vmatpush2.xpose.msra.mxu0 0.0
    %1554 = vmatprep.subr.mxu0 0.0
    %1555 = vmatpush2.xpose.msra.mxu0 0.0
    %1556 = vmatprep.subr.mxu0 0.0
    %1557 = vmatpush2.xpose.msra.mxu0 0.0
    %1558 = vmatprep.subr.mxu0 0.0
    %1559 = vmatpush2.xpose.msra.mxu0 0.0
    %1560 = vmatprep.mubr.f32.mxu0 0.0
    %1561 = vmatmul.mubr.f32.gmra.mxu0 %v1492
    %v1562 = vpop.f32.mrf.mxu0
    %v1563 = vadd.f32 0.0, %v1562
    %v1564 = vpop.f32.mrf.mxu0
    %1565 = vdwg.mxu0
    %v1566 = vmul.f32 %v1485, 0.35355338
    %v1567 = vmul.f32 %v1563, 0.35355338
    %v1568 = vsel %vm165, %v1566, -inf
    %1569 = vmax.xlane.f32.xlu0 %v1568
    %v1570 = vpop.xlane.xlu0 %1569
    %v1571 = vsel %vm165, %v1567, -inf
    %1572 = vmax.xlane.f32.xlu0 %v1571
    %v1573 = vpop.xlane.xlu0 %1572
    %v1574 = vsub.f32 %v1566, %v1570
    %v1575 = vsub.f32 %v1567, %v1573
    %v1576 = vmul.f32 %v1574, 1.442695
    %v1577 = vpow.pop %v1576
    %v1578 = vmul.f32 %v1575, 1.442695
    %v1579 = vpow.pop %v1578
    %v1580 = vsel %vm165, %v1577, 0.0
    %1581 = vadd.xlane.f32.xlu0 %v1580
    %v1582 = vpop.xlane.xlu0 %1581
    %v1583 = vsel %vm165, %v1579, 0.0
    %1584 = vadd.xlane.f32.xlu0 %v1583
    %v1585 = vpop.xlane.xlu0 %1584
    %v1586 = vrcp.pop %v1582
    %v1587 = vrcp.pop %v1585
    %v1588 = vmul.f32 %v1577, %v1586
    %v1589 = vmul.f32 %v1579, %v1587
    %s1590 = scalar_lea.vmem %s7, 48
    %1591 = vst.msk [vmem:[%s1590] sm:$0xff] %vm165, %v1588
    %1592 = vst.msk [vmem:[%s1590 + $0x8] sm:$0xff] %vm165, %v1589
    %1593 = vrot.lane.b32.xlu0 %v150, 40
    %v1594 = vpop.permute.xlu0 %1593
    %v1597 = vsel %vm165, %v1588, 0
    %1599 = vmatprep.subr.mxu0 0.0
    %1600 = vmatpush1.msra.mxu0 0.0
    %1601 = vmatprep.subr.mxu0 0.0
    %1602 = vmatpush1.msra.mxu0 0.0
    %1603 = vmatprep.subr.mxu0 0.0
    %1604 = vmatpush1.msra.mxu0 0.0
    %1605 = vmatprep.subr.mxu0 0.0
    %1606 = vmatpush1.msra.mxu0 0.0
    %1607 = vmatprep.subr.mxu0 0.0
    %1608 = vmatpush1.msra.mxu0 0.0
    %1609 = vmatprep.subr.mxu0 0.0
    %1610 = vmatpush1.msra.mxu0 0.0
    %1611 = vmatprep.subr.mxu0 0.0
    %1612 = vmatpush1.msra.mxu0 0.0
    %1613 = vmatprep.subr.mxu0 0.0
    %1614 = vmatpush1.msra.mxu0 0.0
    %1615 = vmatprep.subr.mxu0 0.0
    %1616 = vmatpush1.msra.mxu0 0.0
    %1617 = vmatprep.subr.mxu0 0.0
    %1618 = vmatpush1.msra.mxu0 0.0
    %1619 = vmatprep.subr.mxu0 0.0
    %1620 = vmatpush1.msra.mxu0 0.0
    %1621 = vmatprep.subr.mxu0 0.0
    %1622 = vmatpush1.msra.mxu0 0.0
    %1623 = vmatprep.subr.mxu0 0.0
    %1624 = vmatpush1.msra.mxu0 0.0
    %1625 = vmatprep.subr.mxu0 0.0
    %1626 = vmatpush1.msra.mxu0 0.0
    %1627 = vmatprep.subr.mxu0 0.0
    %1628 = vmatpush1.msra.mxu0 0.0
    %1629 = vmatprep.subr.mxu0 0.0
    %1630 = vmatpush1.msra.mxu0 %v1594
    %1631 = vmatprep.subr.mxu0 0.0
    %1632 = vmatpush2.msra.mxu0 0.0
    %1633 = vmatprep.subr.mxu0 0.0
    %1634 = vmatpush2.msra.mxu0 0.0
    %1635 = vmatprep.subr.mxu0 0.0
    %1636 = vmatpush2.msra.mxu0 0.0
    %1637 = vmatprep.subr.mxu0 0.0
    %1638 = vmatpush2.msra.mxu0 0.0
    %1639 = vmatprep.subr.mxu0 0.0
    %1640 = vmatpush2.msra.mxu0 0.0
    %1641 = vmatprep.subr.mxu0 0.0
    %1642 = vmatpush2.msra.mxu0 0.0
    %1643 = vmatprep.subr.mxu0 0.0
    %1644 = vmatpush2.msra.mxu0 0.0
    %1645 = vmatprep.subr.mxu0 0.0
    %1646 = vmatpush2.msra.mxu0 0.0
    %1647 = vmatprep.subr.mxu0 0.0
    %1648 = vmatpush2.msra.mxu0 0.0
    %1649 = vmatprep.subr.mxu0 0.0
    %1650 = vmatpush2.msra.mxu0 0.0
    %1651 = vmatprep.subr.mxu0 0.0
    %1652 = vmatpush2.msra.mxu0 0.0
    %1653 = vmatprep.subr.mxu0 0.0
    %1654 = vmatpush2.msra.mxu0 0.0
    %1655 = vmatprep.subr.mxu0 0.0
    %1656 = vmatpush2.msra.mxu0 0.0
    %1657 = vmatprep.subr.mxu0 0.0
    %1658 = vmatpush2.msra.mxu0 0.0
    %1659 = vmatprep.subr.mxu0 0.0
    %1660 = vmatpush2.msra.mxu0 0.0
    %1661 = vmatprep.subr.mxu0 0.0
    %1662 = vmatpush2.msra.mxu0 0.0
    %1663 = vmatprep.mubr.f32.mxu0 0.0
    %1664 = vmatmul.mubr.f32.gmra.mxu0 %v1597
    %v1665 = vpop.f32.mrf.mxu0
    %v1666 = vadd.f32 0.0, %v1665
    %v1667 = vpop.f32.mrf.mxu0
    %1668 = vdwg.mxu0
    %1669 = vrot.lane.b32.xlu0 %v155, 40
    %v1670 = vpop.permute.xlu0 %1669
    %v1673 = vsel %vm165, %v1589, 0
    %1675 = vmatprep.subr.mxu0 0.0
    %1676 = vmatpush1.msra.mxu0 0.0
    %1677 = vmatprep.subr.mxu0 0.0
    %1678 = vmatpush1.msra.mxu0 0.0
    %1679 = vmatprep.subr.mxu0 0.0
    %1680 = vmatpush1.msra.mxu0 0.0
    %1681 = vmatprep.subr.mxu0 0.0
    %1682 = vmatpush1.msra.mxu0 0.0
    %1683 = vmatprep.subr.mxu0 0.0
    %1684 = vmatpush1.msra.mxu0 0.0
    %1685 = vmatprep.subr.mxu0 0.0
    %1686 = vmatpush1.msra.mxu0 0.0
    %1687 = vmatprep.subr.mxu0 0.0
    %1688 = vmatpush1.msra.mxu0 0.0
    %1689 = vmatprep.subr.mxu0 0.0
    %1690 = vmatpush1.msra.mxu0 0.0
    %1691 = vmatprep.subr.mxu0 0.0
    %1692 = vmatpush1.msra.mxu0 0.0
    %1693 = vmatprep.subr.mxu0 0.0
    %1694 = vmatpush1.msra.mxu0 0.0
    %1695 = vmatprep.subr.mxu0 0.0
    %1696 = vmatpush1.msra.mxu0 0.0
    %1697 = vmatprep.subr.mxu0 0.0
    %1698 = vmatpush1.msra.mxu0 0.0
    %1699 = vmatprep.subr.mxu0 0.0
    %1700 = vmatpush1.msra.mxu0 0.0
    %1701 = vmatprep.subr.mxu0 0.0
    %1702 = vmatpush1.msra.mxu0 0.0
    %1703 = vmatprep.subr.mxu0 0.0
    %1704 = vmatpush1.msra.mxu0 0.0
    %1705 = vmatprep.subr.mxu0 0.0
    %1706 = vmatpush1.msra.mxu0 %v1670
    %1707 = vmatprep.subr.mxu0 0.0
    %1708 = vmatpush2.msra.mxu0 0.0
    %1709 = vmatprep.subr.mxu0 0.0
    %1710 = vmatpush2.msra.mxu0 0.0
    %1711 = vmatprep.subr.mxu0 0.0
    %1712 = vmatpush2.msra.mxu0 0.0
    %1713 = vmatprep.subr.mxu0 0.0
    %1714 = vmatpush2.msra.mxu0 0.0
    %1715 = vmatprep.subr.mxu0 0.0
    %1716 = vmatpush2.msra.mxu0 0.0
    %1717 = vmatprep.subr.mxu0 0.0
    %1718 = vmatpush2.msra.mxu0 0.0
    %1719 = vmatprep.subr.mxu0 0.0
    %1720 = vmatpush2.msra.mxu0 0.0
    %1721 = vmatprep.subr.mxu0 0.0
    %1722 = vmatpush2.msra.mxu0 0.0
    %1723 = vmatprep.subr.mxu0 0.0
    %1724 = vmatpush2.msra.mxu0 0.0
    %1725 = vmatprep.subr.mxu0 0.0
    %1726 = vmatpush2.msra.mxu0 0.0
    %1727 = vmatprep.subr.mxu0 0.0
    %1728 = vmatpush2.msra.mxu0 0.0
    %1729 = vmatprep.subr.mxu0 0.0
    %1730 = vmatpush2.msra.mxu0 0.0
    %1731 = vmatprep.subr.mxu0 0.0
    %1732 = vmatpush2.msra.mxu0 0.0
    %1733 = vmatprep.subr.mxu0 0.0
    %1734 = vmatpush2.msra.mxu0 0.0
    %1735 = vmatprep.subr.mxu0 0.0
    %1736 = vmatpush2.msra.mxu0 0.0
    %1737 = vmatprep.subr.mxu0 0.0
    %1738 = vmatpush2.msra.mxu0 0.0
    %1739 = vmatprep.mubr.f32.mxu0 0.0
    %1740 = vmatmul.mubr.f32.gmra.mxu0 %v1673
    %v1741 = vpop.f32.mrf.mxu0
    %v1742 = vadd.f32 0.0, %v1741
    %v1743 = vpop.f32.mrf.mxu0
    %1744 = vdwg.mxu0
    %v1746 = vsel %vm165, %v1666, 0
    %v1749 = vsel %vm165, %v1742, 0
    %1751 = vmatprep.subr.mxu0 0.0
    %1752 = vmatpush1.msra.mxu0 0.0
    %1753 = vmatprep.subr.mxu0 0.0
    %1754 = vmatpush1.msra.mxu0 0.0
    %1755 = vmatprep.subr.mxu0 0.0
    %1756 = vmatpush1.msra.mxu0 0.0
    %1757 = vmatprep.subr.mxu0 0.0
    %1758 = vmatpush1.msra.mxu0 0.0
    %1759 = vmatprep.subr.mxu0 0.0
    %1760 = vmatpush1.msra.mxu0 0.0
    %1761 = vmatprep.subr.mxu0 0.0
    %1762 = vmatpush1.msra.mxu0 0.0
    %1763 = vmatprep.subr.mxu0 0.0
    %1764 = vmatpush1.msra.mxu0 0.0
    %1765 = vmatprep.subr.mxu0 0.0
    %1766 = vmatpush1.msra.mxu0 0.0
    %1767 = vmatprep.subr.mxu0 0.0
    %1768 = vmatpush1.msra.mxu0 0.0
    %1769 = vmatprep.subr.mxu0 0.0
    %1770 = vmatpush1.msra.mxu0 0.0
    %1771 = vmatprep.subr.mxu0 0.0
    %1772 = vmatpush1.msra.mxu0 0.0
    %1773 = vmatprep.subr.mxu0 0.0
    %1774 = vmatpush1.msra.mxu0 0.0
    %1775 = vmatprep.subr.mxu0 0.0
    %1776 = vmatpush1.msra.mxu0 0.0
    %1777 = vmatprep.subr.mxu0 0.0
    %1778 = vmatpush1.msra.mxu0 0.0
    %1779 = vmatprep.subr.mxu0 0.0
    %1780 = vmatpush1.msra.mxu0 0.0
    %1781 = vmatprep.subr.mxu0 0.0
    %1782 = vmatpush1.msra.mxu0 %v161
    %1783 = vmatprep.subr.mxu0 0.0
    %1784 = vmatpush2.msra.mxu0 0.0
    %1785 = vmatprep.subr.mxu0 0.0
    %1786 = vmatpush2.msra.mxu0 0.0
    %1787 = vmatprep.subr.mxu0 0.0
    %1788 = vmatpush2.msra.mxu0 0.0
    %1789 = vmatprep.subr.mxu0 0.0
    %1790 = vmatpush2.msra.mxu0 0.0
    %1791 = vmatprep.subr.mxu0 0.0
    %1792 = vmatpush2.msra.mxu0 0.0
    %1793 = vmatprep.subr.mxu0 0.0
    %1794 = vmatpush2.msra.mxu0 0.0
    %1795 = vmatprep.subr.mxu0 0.0
    %1796 = vmatpush2.msra.mxu0 0.0
    %1797 = vmatprep.subr.mxu0 0.0
    %1798 = vmatpush2.msra.mxu0 0.0
    %1799 = vmatprep.subr.mxu0 0.0
    %1800 = vmatpush2.msra.mxu0 0.0
    %1801 = vmatprep.subr.mxu0 0.0
    %1802 = vmatpush2.msra.mxu0 0.0
    %1803 = vmatprep.subr.mxu0 0.0
    %1804 = vmatpush2.msra.mxu0 0.0
    %1805 = vmatprep.subr.mxu0 0.0
    %1806 = vmatpush2.msra.mxu0 0.0
    %1807 = vmatprep.subr.mxu0 0.0
    %1808 = vmatpush2.msra.mxu0 0.0
    %1809 = vmatprep.subr.mxu0 0.0
    %1810 = vmatpush2.msra.mxu0 0.0
    %1811 = vmatprep.subr.mxu0 0.0
    %1812 = vmatpush2.msra.mxu0 0.0
    %1813 = vmatprep.subr.mxu0 0.0
    %1814 = vmatpush2.msra.mxu0 0.0
    %1815 = vmatprep.mubr.f32.mxu0 0.0
    %1816 = vmatmul.mubr.f32.gmra.mxu0 %v1746
    %v1817 = vpop.f32.mrf.mxu0
    %v1818 = vadd.f32 0.0, %v1817
    %v1819 = vpop.f32.mrf.mxu0
    %1820 = vmatprep.mubr.f32.mxu0 0.0
    %1821 = vmatmul.mubr.f32.gmra.mxu0 %v1749
    %v1822 = vpop.f32.mrf.mxu0
    %v1823 = vadd.f32 0.0, %v1822
    %v1824 = vpop.f32.mrf.mxu0
    %1825 = vdwg.mxu0
    %v1826 = vadd.f32 %v1408, %v1818
    %v1827 = vadd.f32 %v1409, %v1823
    %v1828 = vlaneseq
    %v1829 = vshrl.u32 %v1828, 7
    %v1830 = vsub.s32 6, %v1829
    %v1831 = vrot.slane %v28, %v1830
    %v1832 = vadd.f32 %v1826, %v1831
    %v1833 = vadd.f32 %v1827, %v1831
    %v1834 = vadd.f32 %v1832, %v26
    %v1835 = vadd.f32 %v1833, %v27
    %v1836 = vsel %vm29, %v1834, 0.0
    %1837 = vadd.xlane.f32.xlu0 %v1836
    %v1838 = vpop.xlane.xlu0 %1837
    %v1839 = vsel %vm29, %v1835, 0.0
    %1840 = vadd.xlane.f32.xlu0 %v1839
    %v1841 = vpop.xlane.xlu0 %1840
    %v1842 = vmul.f32 %v1838, %v36
    %v1843 = vmul.f32 %v1841, %v36
    %v1844 = vsub.f32 %v1834, %v1842
    %v1845 = vsub.f32 %v1835, %v1843
    %v1846 = vmul.f32 %v1844, %v1844
    %v1847 = vmul.f32 %v1845, %v1845
    %v1848 = vsel %vm29, %v1846, 0.0
    %1849 = vadd.xlane.f32.xlu0 %v1848
    %v1850 = vpop.xlane.xlu0 %1849
    %v1851 = vsel %vm29, %v1847, 0.0
    %1852 = vadd.xlane.f32.xlu0 %v1851
    %v1853 = vpop.xlane.xlu0 %1852
    %v1854 = vmul.f32 %v1850, %v36
    %v1855 = vmul.f32 %v1853, %v36
    %v1856 = vadd.f32 %v1854, 1e-05
    %v1857 = vadd.f32 %v1855, 1e-05
    %v1858 = vrsqrt.pop %v1856
    %v1859 = vrsqrt.pop %v1857
    %v1860 = vmul.f32 %v1844, %v1858
    %v1861 = vmul.f32 %v1845, %v1859
    %v1862 = vlaneseq
    %v1863 = vshrl.u32 %v1862, 7
    %v1864 = vsub.s32 4, %v1863
    %v1865 = vrot.slane %v28, %v1864
    %v1866 = vmul.f32 %v1860, %v1865
    %v1867 = vmul.f32 %v1861, %v1865
    %v1868 = vlaneseq
    %v1869 = vshrl.u32 %v1868, 7
    %v1870 = vsub.s32 5, %v1869
    %v1871 = vrot.slane %v28, %v1870
    %v1872 = vadd.f32 %v1866, %v1871
    %v1873 = vadd.f32 %v1867, %v1871
    %v1874 = vld [vmem:[%s3] sm:$0xff]
    %v1875 = vld [vmem:[%s3 + $0x8] sm:$0xff]
    %v1876 = vld [vmem:[%s3 + $0x10] sm:$0xff]
    %v1877 = vld [vmem:[%s3 + $0x18] sm:$0xff]
    %v1878 = vlaneseq
    %v1879 = vshrl.u32 %v1878, 7
    %v1880 = vsub.s32 1, %v1879
    %v1881 = vrot.slane %v28, %v1880
    %v1883 = vsel %vm29, %v1872, 0
    %v1886 = vsel %vm29, %v1873, 0
    %1888 = vmatprep.subr.mxu0 0.0
    %1889 = vmatpush1.msra.mxu0 0.0
    %1890 = vmatprep.subr.mxu0 0.0
    %1891 = vmatpush1.msra.mxu0 0.0
    %1892 = vmatprep.subr.mxu0 0.0
    %1893 = vmatpush1.msra.mxu0 0.0
    %1894 = vmatprep.subr.mxu0 0.0
    %1895 = vmatpush1.msra.mxu0 0.0
    %1896 = vmatprep.subr.mxu0 0.0
    %1897 = vmatpush1.msra.mxu0 0.0
    %1898 = vmatprep.subr.mxu0 0.0
    %1899 = vmatpush1.msra.mxu0 0.0
    %1900 = vmatprep.subr.mxu0 0.0
    %1901 = vmatpush1.msra.mxu0 0.0
    %1902 = vmatprep.subr.mxu0 0.0
    %1903 = vmatpush1.msra.mxu0 0.0
    %1904 = vmatprep.subr.mxu0 0.0
    %1905 = vmatpush1.msra.mxu0 0.0
    %1906 = vmatprep.subr.mxu0 0.0
    %1907 = vmatpush1.msra.mxu0 0.0
    %1908 = vmatprep.subr.mxu0 0.0
    %1909 = vmatpush1.msra.mxu0 0.0
    %1910 = vmatprep.subr.mxu0 0.0
    %1911 = vmatpush1.msra.mxu0 0.0
    %1912 = vmatprep.subr.mxu0 0.0
    %1913 = vmatpush1.msra.mxu0 %v1877
    %1914 = vmatprep.subr.mxu0 0.0
    %1915 = vmatpush1.msra.mxu0 %v1876
    %1916 = vmatprep.subr.mxu0 0.0
    %1917 = vmatpush1.msra.mxu0 %v1875
    %1918 = vmatprep.subr.mxu0 0.0
    %1919 = vmatpush1.msra.mxu0 %v1874
    %1920 = vmatprep.subr.mxu0 0.0
    %1921 = vmatpush2.msra.mxu0 0.0
    %1922 = vmatprep.subr.mxu0 0.0
    %1923 = vmatpush2.msra.mxu0 0.0
    %1924 = vmatprep.subr.mxu0 0.0
    %1925 = vmatpush2.msra.mxu0 0.0
    %1926 = vmatprep.subr.mxu0 0.0
    %1927 = vmatpush2.msra.mxu0 0.0
    %1928 = vmatprep.subr.mxu0 0.0
    %1929 = vmatpush2.msra.mxu0 0.0
    %1930 = vmatprep.subr.mxu0 0.0
    %1931 = vmatpush2.msra.mxu0 0.0
    %1932 = vmatprep.subr.mxu0 0.0
    %1933 = vmatpush2.msra.mxu0 0.0
    %1934 = vmatprep.subr.mxu0 0.0
    %1935 = vmatpush2.msra.mxu0 0.0
    %1936 = vmatprep.subr.mxu0 0.0
    %1937 = vmatpush2.msra.mxu0 0.0
    %1938 = vmatprep.subr.mxu0 0.0
    %1939 = vmatpush2.msra.mxu0 0.0
    %1940 = vmatprep.subr.mxu0 0.0
    %1941 = vmatpush2.msra.mxu0 0.0
    %1942 = vmatprep.subr.mxu0 0.0
    %1943 = vmatpush2.msra.mxu0 0.0
    %1944 = vmatprep.subr.mxu0 0.0
    %1945 = vmatpush2.msra.mxu0 0.0
    %1946 = vmatprep.subr.mxu0 0.0
    %1947 = vmatpush2.msra.mxu0 0.0
    %1948 = vmatprep.subr.mxu0 0.0
    %1949 = vmatpush2.msra.mxu0 0.0
    %1950 = vmatprep.subr.mxu0 0.0
    %1951 = vmatpush2.msra.mxu0 0.0
    %1952 = vmatprep.mubr.f32.mxu0 0.0
    %1953 = vmatmul.mubr.f32.gmra.mxu0 %v1883
    %v1954 = vpop.f32.mrf.mxu0
    %v1955 = vadd.f32 %v1881, %v1954
    %v1956 = vpop.f32.mrf.mxu0
    %1957 = vmatprep.mubr.f32.mxu0 0.0
    %1958 = vmatmul.mubr.f32.gmra.mxu0 %v1886
    %v1959 = vpop.f32.mrf.mxu0
    %v1960 = vadd.f32 %v1881, %v1959
    %v1961 = vpop.f32.mrf.mxu0
    %1962 = vdwg.mxu0
    %v1963 = vmul.f32 %v1955, 0.5
    %v1964 = vmul.f32 %v1960, 0.5
    %v1965 = vmul.f32 %v1955, 0.70710677
    %v1966 = vmul.f32 %v1960, 0.70710677
    %v1967 = verf.f32.pop %v1965
    %v1968 = verf.f32.pop %v1966
    %v1969 = vadd.f32 %v1967, 1.0
    %v1970 = vadd.f32 %v1968, 1.0
    %v1971 = vmul.f32 %v1963, %v1969
    %v1972 = vmul.f32 %v1964, %v1970
    %v1973 = vld [vmem:[%s4] sm:$0xff]
    %v1974 = vld [vmem:[%s4 + $0x8] sm:$0xff]
    %v1975 = vld [vmem:[%s4 + $0x10] sm:$0xff]
    %v1976 = vld [vmem:[%s4 + $0x18] sm:$0xff]
    %v1977 = vld [vmem:[%s4 + $0x20] sm:$0xff]
    %v1978 = vld [vmem:[%s4 + $0x28] sm:$0xff]
    %v1979 = vld [vmem:[%s4 + $0x30] sm:$0xff]
    %v1980 = vld [vmem:[%s4 + $0x38] sm:$0xff]
    %v1981 = vlaneseq
    %v1982 = vshrl.u32 %v1981, 7
    %v1983 = vsub.s32 7, %v1982
    %v1984 = vrot.slane %v28, %v1983
    %vm1985 = vcmask 523264
    %v1987 = vsel %vm1985, %v1971, 0
    %v1990 = vsel %vm1985, %v1972, 0
    %1992 = vmatprep.subr.mxu0 0.0
    %1993 = vmatpush1.msra.mxu0 0.0
    %1994 = vmatprep.subr.mxu0 0.0
    %1995 = vmatpush1.msra.mxu0 0.0
    %1996 = vmatprep.subr.mxu0 0.0
    %1997 = vmatpush1.msra.mxu0 0.0
    %1998 = vmatprep.subr.mxu0 0.0
    %1999 = vmatpush1.msra.mxu0 0.0
    %2000 = vmatprep.subr.mxu0 0.0
    %2001 = vmatpush1.msra.mxu0 0.0
    %2002 = vmatprep.subr.mxu0 0.0
    %2003 = vmatpush1.msra.mxu0 0.0
    %2004 = vmatprep.subr.mxu0 0.0
    %2005 = vmatpush1.msra.mxu0 0.0
    %2006 = vmatprep.subr.mxu0 0.0
    %2007 = vmatpush1.msra.mxu0 0.0
    %2008 = vmatprep.subr.mxu0 0.0
    %2009 = vmatpush1.msra.mxu0 %v1980
    %2010 = vmatprep.subr.mxu0 0.0
    %2011 = vmatpush1.msra.mxu0 %v1979
    %2012 = vmatprep.subr.mxu0 0.0
    %2013 = vmatpush1.msra.mxu0 %v1978
    %2014 = vmatprep.subr.mxu0 0.0
    %2015 = vmatpush1.msra.mxu0 %v1977
    %2016 = vmatprep.subr.mxu0 0.0
    %2017 = vmatpush1.msra.mxu0 %v1976
    %2018 = vmatprep.subr.mxu0 0.0
    %2019 = vmatpush1.msra.mxu0 %v1975
    %2020 = vmatprep.subr.mxu0 0.0
    %2021 = vmatpush1.msra.mxu0 %v1974
    %2022 = vmatprep.subr.mxu0 0.0
    %2023 = vmatpush1.msra.mxu0 %v1973
    %2024 = vmatprep.subr.mxu0 0.0
    %2025 = vmatpush2.msra.mxu0 0.0
    %2026 = vmatprep.subr.mxu0 0.0
    %2027 = vmatpush2.msra.mxu0 0.0
    %2028 = vmatprep.subr.mxu0 0.0
    %2029 = vmatpush2.msra.mxu0 0.0
    %2030 = vmatprep.subr.mxu0 0.0
    %2031 = vmatpush2.msra.mxu0 0.0
    %2032 = vmatprep.subr.mxu0 0.0
    %2033 = vmatpush2.msra.mxu0 0.0
    %2034 = vmatprep.subr.mxu0 0.0
    %2035 = vmatpush2.msra.mxu0 0.0
    %2036 = vmatprep.subr.mxu0 0.0
    %2037 = vmatpush2.msra.mxu0 0.0
    %2038 = vmatprep.subr.mxu0 0.0
    %2039 = vmatpush2.msra.mxu0 0.0
    %2040 = vmatprep.subr.mxu0 0.0
    %2041 = vmatpush2.msra.mxu0 0.0
    %2042 = vmatprep.subr.mxu0 0.0
    %2043 = vmatpush2.msra.mxu0 0.0
    %2044 = vmatprep.subr.mxu0 0.0
    %2045 = vmatpush2.msra.mxu0 0.0
    %2046 = vmatprep.subr.mxu0 0.0
    %2047 = vmatpush2.msra.mxu0 0.0
    %2048 = vmatprep.subr.mxu0 0.0
    %2049 = vmatpush2.msra.mxu0 0.0
    %2050 = vmatprep.subr.mxu0 0.0
    %2051 = vmatpush2.msra.mxu0 0.0
    %2052 = vmatprep.subr.mxu0 0.0
    %2053 = vmatpush2.msra.mxu0 0.0
    %2054 = vmatprep.subr.mxu0 0.0
    %2055 = vmatpush2.msra.mxu0 0.0
    %2056 = vmatprep.mubr.f32.mxu0 0.0
    %2057 = vmatmul.mubr.f32.gmra.mxu0 %v1987
    %v2058 = vpop.f32.mrf.mxu0
    %v2059 = vadd.f32 %v1984, %v2058
    %v2060 = vpop.f32.mrf.mxu0
    %2061 = vmatprep.mubr.f32.mxu0 0.0
    %2062 = vmatmul.mubr.f32.gmra.mxu0 %v1990
    %v2063 = vpop.f32.mrf.mxu0
    %v2064 = vadd.f32 %v1984, %v2063
    %v2065 = vpop.f32.mrf.mxu0
    %2066 = vdwg.mxu0
    %v2067 = vadd.f32 %v2059, %v1834
    %v2068 = vadd.f32 %v2064, %v1835
    %2069 = vst.msk [vmem:[#allocation2] sm:$0xff] %vm29, %v2067
    %2070 = vst.msk [vmem:[#allocation2 + $0x8] sm:$0xff] %vm29, %v2068
    // Predicated region
    $region26: #{transformer_encoder.1} parent=1 // pred_check
      _
    $region27: #{transformer_encoder.1} parent=1 // pred_check_branch
      %2072 = sbr.rel (0) target = $region29
    $region28: #{transformer_encoder.1} parent=1 // pred_region
      %s2074 = ssub.s32 256, 256
      %2075 = vsyncadd [#allocation3], %s2074
      %s2076 = sshll.u32 [#allocation2], 4
      %s2077 = int_to_ptr.vmem [resolvable:$true] %s2076
      %2082 = dma.vmem_to_hbm [thread:$0]  %s2077, 256, %s6, [#allocation3], 128, 128, 8
    $region29: #{transformer_encoder.1} parent=1 // pred_fallthru
      _
    // Predicated region
    $region30: #{transformer_encoder.1} parent=1 // pred_check
      _
    $region31: #{transformer_encoder.1} parent=1 // pred_check_branch
      %2084 = sbr.rel (0) target = $region33
    $region32: #{transformer_encoder.1} parent=1 // pred_region
      _
    $region33: #{transformer_encoder.1} parent=1 // pred_fallthru
      _
    // Predicated region
    $region34: #{transformer_encoder.1} parent=1 // pred_check
      _
    $region35: #{transformer_encoder.1} parent=1 // pred_check_branch
      %2086 = sbr.rel (0) target = $region37
    $region36: #{transformer_encoder.1} parent=1 // pred_region
      %2087 = dma.done [#allocation3], 256
    $region37: #{transformer_encoder.1} parent=1 // pred_fallthru
      _
    // Predicated region
    $region38: #{transformer_encoder.1} parent=1 // pred_check
      _
    $region39: #{transformer_encoder.1} parent=1 // pred_check_branch
      %2089 = sbr.rel (0) target = $region41
    $region40: #{transformer_encoder.1} parent=1 // pred_region
      _
    $region41: #{transformer_encoder.1} parent=1 // pred_fallthru
      _
    %2090 = vsyncpa [#allocation3], 1

</llo_original>
